<compile_context>
chip_gen: v6e
topology: v6e:2x2x1
jax: 0.10.0
libtpu: 0.0.40
codegen_flags: <defaults>
</compile_context>

<pallas_src>
import jax
import jax.numpy as jnp
from jax import lax
from jax.experimental import pallas as pl
from jax.experimental.pallas import tpu as pltpu  # noqa: F401  (TPU backend)

# ----------------------------- configuration --------------------------------
B = 2                          # batch
C = 3                          # RGB (ImageNet normalization implies 3)
IMG = 16                       # image spatial size
PS = 4                         # patch size
P = (IMG // PS) ** 2           # 16 patches / image
PATCH_DIM = C * PS * PS        # 48
D = 32                         # embedding dim
N = P + 1                      # tokens incl. CLS
HEADS = 2
HD = D // HEADS                # 16
MLP = 64
MASK_RADIUS = 4
S = 3 * B                      # total sequences through the shared backbone (6)
R = S * N                      # total token rows in the fused layout (102)

IMAGENET_MEAN = jnp.array([0.485, 0.456, 0.406], jnp.float32)
IMAGENET_STD = jnp.array([0.229, 0.224, 0.225], jnp.float32)

NEG_INF = -1e9


# --------------------------- frequency filtering ----------------------------
def generate_circular_mask(size: int, radius: int) -> jnp.ndarray:
    """Binary circular low-pass mask (applied on fftshift'ed spectrum)."""
    center = size // 2
    yy, xx = jnp.meshgrid(jnp.arange(size), jnp.arange(size), indexing="ij")
    dist = jnp.sqrt((yy - center) ** 2 + (xx - center) ** 2).astype(jnp.float32)
    return (dist <= radius).astype(jnp.float32)


# ------------------------------ small helpers --------------------------------
def _layernorm(x, w, b, eps=1e-6):
    mu = jnp.mean(x, axis=-1, keepdims=True)
    var = jnp.mean(jnp.square(x - mu), axis=-1, keepdims=True)
    return (x - mu) * jax.lax.rsqrt(var + eps) * w + b


def _bf16_dot(a, w_bf16):
    """bf16 MXU matmul with f32 accumulation (w is pre-cast to bf16)."""
    return jnp.dot(a.astype(jnp.bfloat16), w_bf16,
                   preferred_element_type=jnp.float32)


# ----------------------- fused MFViT Pallas kernel ---------------------------
def mfvit_kernel(patches_ref, tok_bias_ref, attn_mask_ref,
                 wpe, bpe,
                 ln1w, ln1b, wqkv, bqkv, wo, bo,
                 ln2w, ln2b, w1, b1, w2, b2, lnfw, lnfb,
                 wfp, bfp, wcls, bcls,
                 out_ref):
    # --- batched patch embedding for ALL 3*B images in one MXU matmul -------
    # ImageNet normalization is folded into (wpe, bpe): raw [0,1] pixels go in.
    emb_all = _bf16_dot(patches_ref[...], wpe[...]) + bpe[...]     # (S*P, D) f32

    # Token layout: rows [0:S] = CLS tokens of seq 0..S-1, rows [S:] = patch
    # tokens grouped by sequence. tok_bias already contains cls+pos for the
    # CLS rows and the tiled positional embeddings for the patch rows.
    tok_bias = tok_bias_ref[...]                                   # (R, D)
    tokens = jnp.concatenate(
        [tok_bias[0:S, :], emb_all + tok_bias[S:, :]], axis=0)     # (R, D)

    # --- attention block (CLS queries only; block-diag mask over sequences) -
    h = _layernorm(tokens, ln1w[...], ln1b[...])                   # (R, D)
    qkv = _bf16_dot(h, wqkv[...]) + bqkv[...]                      # (R, 3D)
    mask = attn_mask_ref[...]                                      # (S, R) additive
    wo_v = wo[...]

    attn = None
    for hh in range(HEADS):                                        # 2 iters, unrolled
        lo = hh * HD
        qh = qkv[0:S, lo:lo + HD]                                  # (S, HD); 1/sqrt(HD) folded in wqkv
        kh = qkv[:, D + lo:D + lo + HD]                            # (R, HD)
        vh = qkv[:, 2 * D + lo:2 * D + lo + HD]                    # (R, HD)
        # q @ k^T without materializing the transpose.
        sc = lax.dot_general(qh.astype(jnp.bfloat16), kh.astype(jnp.bfloat16),
                             (((1,), (1,)), ((), ())),
                             preferred_element_type=jnp.float32)   # (S, R)
        sc = sc + mask
        sc = sc - jnp.max(sc, axis=-1, keepdims=True)
        p = jnp.exp(sc)
        p = p * pl.reciprocal(jnp.sum(p, axis=-1, keepdims=True), approx=True)
        oh = jnp.dot(p.astype(jnp.bfloat16), vh.astype(jnp.bfloat16),
                     preferred_element_type=jnp.float32)           # (S, HD)
        # Per-head output projection via sublane slices of wo
        # (avoids lane-axis head concatenate / XLU relayout).
        proj = _bf16_dot(oh, wo_v[lo:lo + HD, :])                  # (S, D)
        attn = proj if attn is None else attn + proj
    cls_tok = tokens[0:S, :] + attn + bo[...]                      # (S, D)

    # --- MLP block + final norm (only the CLS rows are consumed downstream) -
    h2 = _layernorm(cls_tok, ln2w[...], ln2b[...])
    m = _bf16_dot(h2, w1[...]) + b1[...]
    # TODO(synk): PyTorch nn.GELU defaults to exact erf; tanh approximation used here.
    m = jax.nn.gelu(m, approximate=True)
    m = _bf16_dot(m, w2[...]) + b2[...]
    cls_tok = cls_tok + m
    cls_all = _layernorm(cls_tok, lnfw[...], lnfb[...])            # (S, D): [x0,x1,l0,l1,h0,h1]

    # --- features_processor + cls_head, fused --------------------------------
    wfp_v = wfp[...]
    hcat = (_bf16_dot(cls_all[0:B, :], wfp_v[0:D, :])
            + _bf16_dot(cls_all[B:2 * B, :], wfp_v[D:2 * D, :])
            + _bf16_dot(cls_all[2 * B:3 * B, :], wfp_v[2 * D:3 * D, :])
            + bfp[...])
    hcat = jax.nn.gelu(hcat, approximate=True)
    out_ref[...] = _bf16_dot(hcat, wcls[...]) + bcls[...]          # (B, 1) logits


_KERNEL_WEIGHT_NAMES = ("wpe", "bpe",
                        "ln1_w", "ln1_b", "wqkv", "bqkv", "wo", "bo",
                        "ln2_w", "ln2_b", "w1", "b1", "w2", "b2",
                        "lnf_w", "lnf_b",
                        "w_fp", "b_fp", "w_cls", "b_cls")


def fused_mfvit_call(patches, tok_bias, attn_mask, kernel_params):
    """Single pallas_call: everything is small enough to live fully in VMEM."""
    weights = [kernel_params[name] for name in _KERNEL_WEIGHT_NAMES]
    return pl.pallas_call(
        mfvit_kernel,
        out_shape=jax.ShapeDtypeStruct((B, 1), jnp.float32),
    )(patches, tok_bias, attn_mask, *weights)


# ------------------------------- glue / setup --------------------------------
def patchify(x):
    """NCHW image -> (batch, P, C*PS*PS) patches (Conv2d(stride=PS) flattening)."""
    Bn, Cn, H, W = x.shape
    x = x.reshape(Bn, Cn, H // PS, PS, W // PS, PS)
    x = x.transpose(0, 2, 4, 1, 3, 5)
    return x.reshape(Bn, (H // PS) * (W // PS), Cn * PS * PS)


def build_token_bias(cls_tok, pos):
    """(R, D) additive bias: rows [0:S] = cls + pos[0], rows [S:] = tiled pos[1:]."""
    top = jnp.tile(cls_tok + pos[0:1, :], (S, 1))                  # (S, D)
    bot = jnp.tile(pos[1:, :], (S, 1))                             # (S*P, D)
    return jnp.concatenate([top, bot], axis=0)                     # (R, D)


def build_cls_attention_mask():
    """(S, R) additive mask: CLS of seq i may attend only to rows of seq i."""
    j = jnp.arange(R)
    seq_of_j = jnp.where(j < S, j, (j - S) // P)                   # (R,)
    i = jnp.arange(S)
    allow = seq_of_j[None, :] == i[:, None]                        # (S, R)
    return jnp.where(allow, 0.0, NEG_INF).astype(jnp.float32)


def prepare_backbone_weights(params):
    """Fold ImageNet norm into patch embed, attn scale into wqkv; cast to bf16."""
    inv_std = 1.0 / IMAGENET_STD
    # Patch row r corresponds to channel r // (PS*PS) given patchify ordering (c, py, px).
    scale_vec = jnp.repeat(inv_std, PS * PS)                       # (PATCH_DIM,)
    shift_vec = jnp.repeat(IMAGENET_MEAN * inv_std, PS * PS)       # (PATCH_DIM,)
    wpe = params["wpe"]
    wpe_folded = wpe * scale_vec[:, None]                          # (PATCH_DIM, D)
    bpe_folded = params["bpe"] - shift_vec[None, :] @ wpe          # (1, D)

    # Fold the attention scale 1/sqrt(HD) into the Q columns of wqkv/bqkv.
    scale = 1.0 / (HD ** 0.5)
    wqkv = params["wqkv"]
    bqkv = params["bqkv"]
    wqkv_folded = jnp.concatenate([wqkv[:, :D] * scale, wqkv[:, D:]], axis=1)
    bqkv_folded = jnp.concatenate([bqkv[:, :D] * scale, bqkv[:, D:]], axis=1)

    kp = dict(params)
    kp["wpe"] = wpe_folded.astype(jnp.bfloat16)
    kp["bpe"] = bpe_folded.astype(jnp.float32)
    kp["wqkv"] = wqkv_folded.astype(jnp.bfloat16)
    kp["bqkv"] = bqkv_folded.astype(jnp.float32)
    for name in ("wo", "w1", "w2", "w_fp", "w_cls"):
        kp[name] = params[name].astype(jnp.bfloat16)
    return kp


def init_params(key):
    ks = jax.random.split(key, 8)
    tn = lambda k, shape: 0.02 * jax.random.truncated_normal(
        k, -2.0, 2.0, shape, jnp.float32)
    z = lambda shape: jnp.zeros(shape, jnp.float32)
    o = lambda shape: jnp.ones(shape, jnp.float32)
    return dict(
        wpe=tn(ks[0], (PATCH_DIM, D)), bpe=z((1, D)),
        cls=z((1, D)), pos=tn(ks[1], (N, D)),
        ln1_w=o((1, D)), ln1_b=z((1, D)),
        wqkv=tn(ks[2], (D, 3 * D)), bqkv=z((1, 3 * D)),
        wo=tn(ks[3], (D, D)), bo=z((1, D)),
        ln2_w=o((1, D)), ln2_b=z((1, D)),
        w1=tn(ks[4], (D, MLP)), b1=z((1, MLP)),
        w2=tn(ks[5], (MLP, D)), b2=z((1, D)),
        lnf_w=o((1, D)), lnf_b=z((1, D)),
        w_fp=tn(ks[6], (3 * D, D)), b_fp=z((1, D)),
        w_cls=tn(ks[7], (D, 1)), b_cls=z((1, 1)),
    )


@jax.jit
def mfvit_forward(x, params):
    """MFViT.forward: x in [0,1], NCHW -> (B, 1) logits."""
    x = x.astype(jnp.float32)
    mask = generate_circular_mask(IMG, MASK_RADIUS)

    # TODO(synk): FFT has no Pallas TPU primitive; frequency split stays in XLA glue.
    fx = jnp.fft.fftshift(jnp.fft.fft2(x), axes=(-2, -1))
    low = jnp.fft.ifft2(jnp.fft.ifftshift(fx * mask, axes=(-2, -1))).real
    low = low.astype(jnp.float32)
    hi = x - low                      # FFT linearity + complementary masks: saves 2nd FFT pair
    low = jnp.clip(low, 0.0, 1.0)     # clamp as in reference (x is already in [0,1])
    hi = jnp.clip(hi, 0.0, 1.0)

    # Stack the three backbone inputs along batch: sequences [x0..xB-1, low.., hi..]
    imgs = jnp.concatenate([x, low, hi], axis=0)               # (3B, C, H, W)
    patches = patchify(imgs).reshape(S * P, PATCH_DIM)         # (3B*P, 48)

    kp = prepare_backbone_weights(params)
    tok_bias = build_token_bias(params["cls"], params["pos"])  # (R, D)
    attn_mask = build_cls_attention_mask()                     # (S, R), constant-folded
    return fused_mfvit_call(patches, tok_bias, attn_mask, kp)


if __name__ == "__main__":
    key = jax.random.PRNGKey(0)
    x = jax.random.uniform(key, (B, C, IMG, IMG), jnp.float32)  # pixels in [0,1]
    params = init_params(jax.random.PRNGKey(42))

    out = mfvit_forward(x, params)
    out = jax.block_until_ready(out)
    assert out.shape == (B, 1), out.shape
    assert jnp.all(jnp.isfinite(out))
    print("KERNEL_OK")
</pallas_src>

<mosaic_0001>
module attributes {stable_mosaic.version = 11 : i64} {
  func.func @mfvit_kernel(%arg0: memref<96x48xf32, #tpu.memory_space<vmem>>, %arg1: memref<102x32xf32, #tpu.memory_space<vmem>>, %arg2: memref<6x102xf32, #tpu.memory_space<vmem>>, %arg3: memref<48x32xbf16, #tpu.memory_space<vmem>>, %arg4: memref<1x32xf32, #tpu.memory_space<vmem>>, %arg5: memref<1x32xf32, #tpu.memory_space<vmem>>, %arg6: memref<1x32xf32, #tpu.memory_space<vmem>>, %arg7: memref<32x96xbf16, #tpu.memory_space<vmem>>, %arg8: memref<1x96xf32, #tpu.memory_space<vmem>>, %arg9: memref<32x32xbf16, #tpu.memory_space<vmem>>, %arg10: memref<1x32xf32, #tpu.memory_space<vmem>>, %arg11: memref<1x32xf32, #tpu.memory_space<vmem>>, %arg12: memref<1x32xf32, #tpu.memory_space<vmem>>, %arg13: memref<32x64xbf16, #tpu.memory_space<vmem>>, %arg14: memref<1x64xf32, #tpu.memory_space<vmem>>, %arg15: memref<64x32xbf16, #tpu.memory_space<vmem>>, %arg16: memref<1x32xf32, #tpu.memory_space<vmem>>, %arg17: memref<1x32xf32, #tpu.memory_space<vmem>>, %arg18: memref<1x32xf32, #tpu.memory_space<vmem>>, %arg19: memref<96x32xbf16, #tpu.memory_space<vmem>>, %arg20: memref<1x32xf32, #tpu.memory_space<vmem>>, %arg21: memref<32x1xbf16, #tpu.memory_space<vmem>>, %arg22: memref<1x1xf32, #tpu.memory_space<vmem>>, %arg23: memref<2x1xf32, #tpu.memory_space<vmem>>) attributes {dimension_semantics = [], scalar_prefetch = 0 : i64, scratch_operands = 0 : i64, tpu.core_type = #tpu.core_type<tc>} {
    %c0 = arith.constant 0 : index
    %c0_0 = arith.constant 0 : index
    %0 = vector.load %arg0[%c0, %c0_0] : memref<96x48xf32, #tpu.memory_space<vmem>>, vector<96x48xf32>
    %c0_1 = arith.constant 0 : index
    %c0_2 = arith.constant 0 : index
    %1 = vector.load %arg3[%c0_1, %c0_2] : memref<48x32xbf16, #tpu.memory_space<vmem>>, vector<48x32xbf16>
    %2 = arith.truncf %0 : vector<96x48xf32> to vector<96x48xbf16>
    %cst = arith.constant dense<0.000000e+00> : vector<96x32xf32>
    %3 = tpu.matmul %2, %1, %cst {dimension_numbers = #tpu.dot_dimension_numbers<[1], [0], [0], [1], [0, 0, 1, 1], [], []>} : vector<96x48xbf16>, vector<48x32xbf16>, vector<96x32xf32> -> vector<96x32xf32>
    %c0_3 = arith.constant 0 : index
    %c0_4 = arith.constant 0 : index
    %4 = vector.load %arg4[%c0_3, %c0_4] : memref<1x32xf32, #tpu.memory_space<vmem>>, vector<1x32xf32>
    %5 = vector.broadcast %4 : vector<1x32xf32> to vector<96x32xf32>
    %6 = arith.addf %3, %5 : vector<96x32xf32>
    %c0_5 = arith.constant 0 : index
    %c0_6 = arith.constant 0 : index
    %7 = vector.load %arg1[%c0_5, %c0_6] : memref<102x32xf32, #tpu.memory_space<vmem>>, vector<102x32xf32>
    %8 = vector.extract_strided_slice %7 {offsets = [0, 0], sizes = [6, 32], strides = [1, 1]} : vector<102x32xf32> to vector<6x32xf32>
    %9 = vector.extract_strided_slice %7 {offsets = [6, 0], sizes = [96, 32], strides = [1, 1]} : vector<102x32xf32> to vector<96x32xf32>
    %10 = arith.addf %6, %9 : vector<96x32xf32>
    %11 = tpu.concatenate %8, %10 in 0 : vector<6x32xf32>, vector<96x32xf32> -> vector<102x32xf32>
    %c0_7 = arith.constant 0 : index
    %c0_8 = arith.constant 0 : index
    %12 = vector.load %arg5[%c0_7, %c0_8] : memref<1x32xf32, #tpu.memory_space<vmem>>, vector<1x32xf32>
    %c0_9 = arith.constant 0 : index
    %c0_10 = arith.constant 0 : index
    %13 = vector.load %arg6[%c0_9, %c0_10] : memref<1x32xf32, #tpu.memory_space<vmem>>, vector<1x32xf32>
    %cst_11 = arith.constant dense<0.000000e+00> : vector<102xf32>
    %14 = vector.multi_reduction <add>, %11, %cst_11 [1] : vector<102x32xf32> to vector<102xf32>
    %15 = vector.shape_cast %14 : vector<102xf32> to vector<102x1xf32>
    %cst_12 = arith.constant 3.200000e+01 : f32
    %16 = vector.broadcast %cst_12 : f32 to vector<102x1xf32>
    %17 = arith.divf %15, %16 : vector<102x1xf32>
    %18 = vector.broadcast %17 : vector<102x1xf32> to vector<102x32xf32>
    %19 = arith.subf %11, %18 : vector<102x32xf32>
    %20 = arith.mulf %19, %19 : vector<102x32xf32>
    %cst_13 = arith.constant dense<0.000000e+00> : vector<102xf32>
    %21 = vector.multi_reduction <add>, %20, %cst_13 [1] : vector<102x32xf32> to vector<102xf32>
    %22 = vector.shape_cast %21 : vector<102xf32> to vector<102x1xf32>
    %cst_14 = arith.constant 3.200000e+01 : f32
    %23 = vector.broadcast %cst_14 : f32 to vector<102x1xf32>
    %24 = arith.divf %22, %23 : vector<102x1xf32>
    %25 = vector.broadcast %17 : vector<102x1xf32> to vector<102x32xf32>
    %26 = arith.subf %11, %25 : vector<102x32xf32>
    %cst_15 = arith.constant 9.99999997E-7 : f32
    %27 = vector.broadcast %cst_15 : f32 to vector<102x1xf32>
    %28 = arith.addf %24, %27 : vector<102x1xf32>
    %29 = math.rsqrt %28 : vector<102x1xf32>
    %30 = vector.broadcast %29 : vector<102x1xf32> to vector<102x32xf32>
    %31 = arith.mulf %26, %30 : vector<102x32xf32>
    %32 = vector.broadcast %12 : vector<1x32xf32> to vector<102x32xf32>
    %33 = arith.mulf %31, %32 : vector<102x32xf32>
    %34 = vector.broadcast %13 : vector<1x32xf32> to vector<102x32xf32>
    %35 = arith.addf %33, %34 : vector<102x32xf32>
    %c0_16 = arith.constant 0 : index
    %c0_17 = arith.constant 0 : index
    %36 = vector.load %arg7[%c0_16, %c0_17] : memref<32x96xbf16, #tpu.memory_space<vmem>>, vector<32x96xbf16>
    %37 = arith.truncf %35 : vector<102x32xf32> to vector<102x32xbf16>
    %cst_18 = arith.constant dense<0.000000e+00> : vector<102x96xf32>
    %38 = tpu.matmul %37, %36, %cst_18 {dimension_numbers = #tpu.dot_dimension_numbers<[1], [0], [0], [1], [0, 0, 1, 1], [], []>} : vector<102x32xbf16>, vector<32x96xbf16>, vector<102x96xf32> -> vector<102x96xf32>
    %c0_19 = arith.constant 0 : index
    %c0_20 = arith.constant 0 : index
    %39 = vector.load %arg8[%c0_19, %c0_20] : memref<1x96xf32, #tpu.memory_space<vmem>>, vector<1x96xf32>
    %40 = vector.broadcast %39 : vector<1x96xf32> to vector<102x96xf32>
    %41 = arith.addf %38, %40 : vector<102x96xf32>
    %c0_21 = arith.constant 0 : index
    %c0_22 = arith.constant 0 : index
    %42 = vector.load %arg2[%c0_21, %c0_22] : memref<6x102xf32, #tpu.memory_space<vmem>>, vector<6x102xf32>
    %c0_23 = arith.constant 0 : index
    %c0_24 = arith.constant 0 : index
    %43 = vector.load %arg9[%c0_23, %c0_24] : memref<32x32xbf16, #tpu.memory_space<vmem>>, vector<32x32xbf16>
    %44 = vector.extract_strided_slice %41 {offsets = [0, 0], sizes = [6, 16], strides = [1, 1]} : vector<102x96xf32> to vector<6x16xf32>
    %45 = vector.extract_strided_slice %41 {offsets = [0, 32], sizes = [102, 16], strides = [1, 1]} : vector<102x96xf32> to vector<102x16xf32>
    %46 = vector.extract_strided_slice %41 {offsets = [0, 64], sizes = [102, 16], strides = [1, 1]} : vector<102x96xf32> to vector<102x16xf32>
    %47 = arith.truncf %44 : vector<6x16xf32> to vector<6x16xbf16>
    %48 = arith.truncf %45 : vector<102x16xf32> to vector<102x16xbf16>
    %cst_25 = arith.constant dense<0.000000e+00> : vector<6x102xf32>
    %49 = tpu.matmul %47, %48, %cst_25 {dimension_numbers = #tpu.dot_dimension_numbers<[1], [1], [0], [0], [0, 0, 1, 0], [], []>} : vector<6x16xbf16>, vector<102x16xbf16>, vector<6x102xf32> -> vector<6x102xf32>
    %50 = arith.addf %49, %42 : vector<6x102xf32>
    %cst_26 = arith.constant dense<0xFF800000> : vector<6xf32>
    %51 = vector.multi_reduction <maximumf>, %50, %cst_26 [1] : vector<6x102xf32> to vector<6xf32>
    %52 = vector.shape_cast %51 : vector<6xf32> to vector<6x1xf32>
    %53 = vector.broadcast %52 : vector<6x1xf32> to vector<6x102xf32>
    %54 = arith.subf %50, %53 : vector<6x102xf32>
    %55 = math.exp %54 : vector<6x102xf32>
    %cst_27 = arith.constant dense<0.000000e+00> : vector<6xf32>
    %56 = vector.multi_reduction <add>, %55, %cst_27 [1] : vector<6x102xf32> to vector<6xf32>
    %57 = vector.shape_cast %56 : vector<6xf32> to vector<6x1xf32>
    %58 = tpu.reciprocal %57 {approx = true} : vector<6x1xf32> -> vector<6x1xf32>
    %59 = vector.broadcast %58 : vector<6x1xf32> to vector<6x102xf32>
    %60 = arith.mulf %55, %59 : vector<6x102xf32>
    %61 = arith.truncf %60 : vector<6x102xf32> to vector<6x102xbf16>
    %62 = arith.truncf %46 : vector<102x16xf32> to vector<102x16xbf16>
    %cst_28 = arith.constant dense<0.000000e+00> : vector<6x16xf32>
    %63 = tpu.matmul %61, %62, %cst_28 {dimension_numbers = #tpu.dot_dimension_numbers<[1], [0], [0], [1], [0, 0, 1, 1], [], []>} : vector<6x102xbf16>, vector<102x16xbf16>, vector<6x16xf32> -> vector<6x16xf32>
    %64 = vector.extract_strided_slice %43 {offsets = [0, 0], sizes = [16, 32], strides = [1, 1]} : vector<32x32xbf16> to vector<16x32xbf16>
    %65 = arith.truncf %63 : vector<6x16xf32> to vector<6x16xbf16>
    %cst_29 = arith.constant dense<0.000000e+00> : vector<6x32xf32>
    %66 = tpu.matmul %65, %64, %cst_29 {dimension_numbers = #tpu.dot_dimension_numbers<[1], [0], [0], [1], [0, 0, 1, 1], [], []>} : vector<6x16xbf16>, vector<16x32xbf16>, vector<6x32xf32> -> vector<6x32xf32>
    %67 = vector.extract_strided_slice %41 {offsets = [0, 16], sizes = [6, 16], strides = [1, 1]} : vector<102x96xf32> to vector<6x16xf32>
    %68 = vector.extract_strided_slice %41 {offsets = [0, 48], sizes = [102, 16], strides = [1, 1]} : vector<102x96xf32> to vector<102x16xf32>
    %69 = vector.extract_strided_slice %41 {offsets = [0, 80], sizes = [102, 16], strides = [1, 1]} : vector<102x96xf32> to vector<102x16xf32>
    %70 = arith.truncf %67 : vector<6x16xf32> to vector<6x16xbf16>
    %71 = arith.truncf %68 : vector<102x16xf32> to vector<102x16xbf16>
    %cst_30 = arith.constant dense<0.000000e+00> : vector<6x102xf32>
    %72 = tpu.matmul %70, %71, %cst_30 {dimension_numbers = #tpu.dot_dimension_numbers<[1], [1], [0], [0], [0, 0, 1, 0], [], []>} : vector<6x16xbf16>, vector<102x16xbf16>, vector<6x102xf32> -> vector<6x102xf32>
    %73 = arith.addf %72, %42 : vector<6x102xf32>
    %cst_31 = arith.constant dense<0xFF800000> : vector<6xf32>
    %74 = vector.multi_reduction <maximumf>, %73, %cst_31 [1] : vector<6x102xf32> to vector<6xf32>
    %75 = vector.shape_cast %74 : vector<6xf32> to vector<6x1xf32>
    %76 = vector.broadcast %75 : vector<6x1xf32> to vector<6x102xf32>
    %77 = arith.subf %73, %76 : vector<6x102xf32>
    %78 = math.exp %77 : vector<6x102xf32>
    %cst_32 = arith.constant dense<0.000000e+00> : vector<6xf32>
    %79 = vector.multi_reduction <add>, %78, %cst_32 [1] : vector<6x102xf32> to vector<6xf32>
    %80 = vector.shape_cast %79 : vector<6xf32> to vector<6x1xf32>
    %81 = tpu.reciprocal %80 {approx = true} : vector<6x1xf32> -> vector<6x1xf32>
    %82 = vector.broadcast %81 : vector<6x1xf32> to vector<6x102xf32>
    %83 = arith.mulf %78, %82 : vector<6x102xf32>
    %84 = arith.truncf %83 : vector<6x102xf32> to vector<6x102xbf16>
    %85 = arith.truncf %69 : vector<102x16xf32> to vector<102x16xbf16>
    %cst_33 = arith.constant dense<0.000000e+00> : vector<6x16xf32>
    %86 = tpu.matmul %84, %85, %cst_33 {dimension_numbers = #tpu.dot_dimension_numbers<[1], [0], [0], [1], [0, 0, 1, 1], [], []>} : vector<6x102xbf16>, vector<102x16xbf16>, vector<6x16xf32> -> vector<6x16xf32>
    %87 = vector.extract_strided_slice %43 {offsets = [16, 0], sizes = [16, 32], strides = [1, 1]} : vector<32x32xbf16> to vector<16x32xbf16>
    %88 = arith.truncf %86 : vector<6x16xf32> to vector<6x16xbf16>
    %cst_34 = arith.constant dense<0.000000e+00> : vector<6x32xf32>
    %89 = tpu.matmul %88, %87, %cst_34 {dimension_numbers = #tpu.dot_dimension_numbers<[1], [0], [0], [1], [0, 0, 1, 1], [], []>} : vector<6x16xbf16>, vector<16x32xbf16>, vector<6x32xf32> -> vector<6x32xf32>
    %90 = arith.addf %66, %89 : vector<6x32xf32>
    %91 = vector.extract_strided_slice %11 {offsets = [0, 0], sizes = [6, 32], strides = [1, 1]} : vector<102x32xf32> to vector<6x32xf32>
    %92 = arith.addf %91, %90 : vector<6x32xf32>
    %c0_35 = arith.constant 0 : index
    %c0_36 = arith.constant 0 : index
    %93 = vector.load %arg10[%c0_35, %c0_36] : memref<1x32xf32, #tpu.memory_space<vmem>>, vector<1x32xf32>
    %94 = vector.broadcast %93 : vector<1x32xf32> to vector<6x32xf32>
    %95 = arith.addf %92, %94 : vector<6x32xf32>
    %c0_37 = arith.constant 0 : index
    %c0_38 = arith.constant 0 : index
    %96 = vector.load %arg11[%c0_37, %c0_38] : memref<1x32xf32, #tpu.memory_space<vmem>>, vector<1x32xf32>
    %c0_39 = arith.constant 0 : index
    %c0_40 = arith.constant 0 : index
    %97 = vector.load %arg12[%c0_39, %c0_40] : memref<1x32xf32, #tpu.memory_space<vmem>>, vector<1x32xf32>
    %cst_41 = arith.constant dense<0.000000e+00> : vector<6xf32>
    %98 = vector.multi_reduction <add>, %95, %cst_41 [1] : vector<6x32xf32> to vector<6xf32>
    %99 = vector.shape_cast %98 : vector<6xf32> to vector<6x1xf32>
    %cst_42 = arith.constant 3.200000e+01 : f32
    %100 = vector.broadcast %cst_42 : f32 to vector<6x1xf32>
    %101 = arith.divf %99, %100 : vector<6x1xf32>
    %102 = vector.broadcast %101 : vector<6x1xf32> to vector<6x32xf32>
    %103 = arith.subf %95, %102 : vector<6x32xf32>
    %104 = arith.mulf %103, %103 : vector<6x32xf32>
    %cst_43 = arith.constant dense<0.000000e+00> : vector<6xf32>
    %105 = vector.multi_reduction <add>, %104, %cst_43 [1] : vector<6x32xf32> to vector<6xf32>
    %106 = vector.shape_cast %105 : vector<6xf32> to vector<6x1xf32>
    %cst_44 = arith.constant 3.200000e+01 : f32
    %107 = vector.broadcast %cst_44 : f32 to vector<6x1xf32>
    %108 = arith.divf %106, %107 : vector<6x1xf32>
    %109 = vector.broadcast %101 : vector<6x1xf32> to vector<6x32xf32>
    %110 = arith.subf %95, %109 : vector<6x32xf32>
    %cst_45 = arith.constant 9.99999997E-7 : f32
    %111 = vector.broadcast %cst_45 : f32 to vector<6x1xf32>
    %112 = arith.addf %108, %111 : vector<6x1xf32>
    %113 = math.rsqrt %112 : vector<6x1xf32>
    %114 = vector.broadcast %113 : vector<6x1xf32> to vector<6x32xf32>
    %115 = arith.mulf %110, %114 : vector<6x32xf32>
    %116 = vector.broadcast %96 : vector<1x32xf32> to vector<6x32xf32>
    %117 = arith.mulf %115, %116 : vector<6x32xf32>
    %118 = vector.broadcast %97 : vector<1x32xf32> to vector<6x32xf32>
    %119 = arith.addf %117, %118 : vector<6x32xf32>
    %c0_46 = arith.constant 0 : index
    %c0_47 = arith.constant 0 : index
    %120 = vector.load %arg13[%c0_46, %c0_47] : memref<32x64xbf16, #tpu.memory_space<vmem>>, vector<32x64xbf16>
    %121 = arith.truncf %119 : vector<6x32xf32> to vector<6x32xbf16>
    %cst_48 = arith.constant dense<0.000000e+00> : vector<6x64xf32>
    %122 = tpu.matmul %121, %120, %cst_48 {dimension_numbers = #tpu.dot_dimension_numbers<[1], [0], [0], [1], [0, 0, 1, 1], [], []>} : vector<6x32xbf16>, vector<32x64xbf16>, vector<6x64xf32> -> vector<6x64xf32>
    %c0_49 = arith.constant 0 : index
    %c0_50 = arith.constant 0 : index
    %123 = vector.load %arg14[%c0_49, %c0_50] : memref<1x64xf32, #tpu.memory_space<vmem>>, vector<1x64xf32>
    %124 = vector.broadcast %123 : vector<1x64xf32> to vector<6x64xf32>
    %125 = arith.addf %122, %124 : vector<6x64xf32>
    %126 = arith.mulf %125, %125 : vector<6x64xf32>
    %127 = arith.mulf %125, %126 : vector<6x64xf32>
    %cst_51 = arith.constant 4.471500e-02 : f32
    %128 = vector.broadcast %cst_51 : f32 to vector<6x64xf32>
    %129 = arith.mulf %128, %127 : vector<6x64xf32>
    %130 = arith.addf %125, %129 : vector<6x64xf32>
    %cst_52 = arith.constant 0.797884583 : f32
    %131 = vector.broadcast %cst_52 : f32 to vector<6x64xf32>
    %132 = arith.mulf %131, %130 : vector<6x64xf32>
    %133 = math.tanh %132 : vector<6x64xf32>
    %cst_53 = arith.constant 1.000000e+00 : f32
    %134 = vector.broadcast %cst_53 : f32 to vector<6x64xf32>
    %135 = arith.addf %134, %133 : vector<6x64xf32>
    %cst_54 = arith.constant 5.000000e-01 : f32
    %136 = vector.broadcast %cst_54 : f32 to vector<6x64xf32>
    %137 = arith.mulf %136, %135 : vector<6x64xf32>
    %138 = arith.mulf %125, %137 : vector<6x64xf32>
    %c0_55 = arith.constant 0 : index
    %c0_56 = arith.constant 0 : index
    %139 = vector.load %arg15[%c0_55, %c0_56] : memref<64x32xbf16, #tpu.memory_space<vmem>>, vector<64x32xbf16>
    %140 = arith.truncf %138 : vector<6x64xf32> to vector<6x64xbf16>
    %cst_57 = arith.constant dense<0.000000e+00> : vector<6x32xf32>
    %141 = tpu.matmul %140, %139, %cst_57 {dimension_numbers = #tpu.dot_dimension_numbers<[1], [0], [0], [1], [0, 0, 1, 1], [], []>} : vector<6x64xbf16>, vector<64x32xbf16>, vector<6x32xf32> -> vector<6x32xf32>
    %c0_58 = arith.constant 0 : index
    %c0_59 = arith.constant 0 : index
    %142 = vector.load %arg16[%c0_58, %c0_59] : memref<1x32xf32, #tpu.memory_space<vmem>>, vector<1x32xf32>
    %143 = vector.broadcast %142 : vector<1x32xf32> to vector<6x32xf32>
    %144 = arith.addf %141, %143 : vector<6x32xf32>
    %145 = arith.addf %95, %144 : vector<6x32xf32>
    %c0_60 = arith.constant 0 : index
    %c0_61 = arith.constant 0 : index
    %146 = vector.load %arg17[%c0_60, %c0_61] : memref<1x32xf32, #tpu.memory_space<vmem>>, vector<1x32xf32>
    %c0_62 = arith.constant 0 : index
    %c0_63 = arith.constant 0 : index
    %147 = vector.load %arg18[%c0_62, %c0_63] : memref<1x32xf32, #tpu.memory_space<vmem>>, vector<1x32xf32>
    %cst_64 = arith.constant dense<0.000000e+00> : vector<6xf32>
    %148 = vector.multi_reduction <add>, %145, %cst_64 [1] : vector<6x32xf32> to vector<6xf32>
    %149 = vector.shape_cast %148 : vector<6xf32> to vector<6x1xf32>
    %cst_65 = arith.constant 3.200000e+01 : f32
    %150 = vector.broadcast %cst_65 : f32 to vector<6x1xf32>
    %151 = arith.divf %149, %150 : vector<6x1xf32>
    %152 = vector.broadcast %151 : vector<6x1xf32> to vector<6x32xf32>
    %153 = arith.subf %145, %152 : vector<6x32xf32>
    %154 = arith.mulf %153, %153 : vector<6x32xf32>
    %cst_66 = arith.constant dense<0.000000e+00> : vector<6xf32>
    %155 = vector.multi_reduction <add>, %154, %cst_66 [1] : vector<6x32xf32> to vector<6xf32>
    %156 = vector.shape_cast %155 : vector<6xf32> to vector<6x1xf32>
    %cst_67 = arith.constant 3.200000e+01 : f32
    %157 = vector.broadcast %cst_67 : f32 to vector<6x1xf32>
    %158 = arith.divf %156, %157 : vector<6x1xf32>
    %159 = vector.broadcast %151 : vector<6x1xf32> to vector<6x32xf32>
    %160 = arith.subf %145, %159 : vector<6x32xf32>
    %cst_68 = arith.constant 9.99999997E-7 : f32
    %161 = vector.broadcast %cst_68 : f32 to vector<6x1xf32>
    %162 = arith.addf %158, %161 : vector<6x1xf32>
    %163 = math.rsqrt %162 : vector<6x1xf32>
    %164 = vector.broadcast %163 : vector<6x1xf32> to vector<6x32xf32>
    %165 = arith.mulf %160, %164 : vector<6x32xf32>
    %166 = vector.broadcast %146 : vector<1x32xf32> to vector<6x32xf32>
    %167 = arith.mulf %165, %166 : vector<6x32xf32>
    %168 = vector.broadcast %147 : vector<1x32xf32> to vector<6x32xf32>
    %169 = arith.addf %167, %168 : vector<6x32xf32>
    %c0_69 = arith.constant 0 : index
    %c0_70 = arith.constant 0 : index
    %170 = vector.load %arg19[%c0_69, %c0_70] : memref<96x32xbf16, #tpu.memory_space<vmem>>, vector<96x32xbf16>
    %171 = vector.extract_strided_slice %169 {offsets = [0, 0], sizes = [2, 32], strides = [1, 1]} : vector<6x32xf32> to vector<2x32xf32>
    %172 = vector.extract_strided_slice %170 {offsets = [0, 0], sizes = [32, 32], strides = [1, 1]} : vector<96x32xbf16> to vector<32x32xbf16>
    %173 = arith.truncf %171 : vector<2x32xf32> to vector<2x32xbf16>
    %cst_71 = arith.constant dense<0.000000e+00> : vector<2x32xf32>
    %174 = tpu.matmul %173, %172, %cst_71 {dimension_numbers = #tpu.dot_dimension_numbers<[1], [0], [0], [1], [0, 0, 1, 1], [], []>} : vector<2x32xbf16>, vector<32x32xbf16>, vector<2x32xf32> -> vector<2x32xf32>
    %175 = vector.extract_strided_slice %169 {offsets = [2, 0], sizes = [2, 32], strides = [1, 1]} : vector<6x32xf32> to vector<2x32xf32>
    %176 = vector.extract_strided_slice %170 {offsets = [32, 0], sizes = [32, 32], strides = [1, 1]} : vector<96x32xbf16> to vector<32x32xbf16>
    %177 = arith.truncf %175 : vector<2x32xf32> to vector<2x32xbf16>
    %cst_72 = arith.constant dense<0.000000e+00> : vector<2x32xf32>
    %178 = tpu.matmul %177, %176, %cst_72 {dimension_numbers = #tpu.dot_dimension_numbers<[1], [0], [0], [1], [0, 0, 1, 1], [], []>} : vector<2x32xbf16>, vector<32x32xbf16>, vector<2x32xf32> -> vector<2x32xf32>
    %179 = arith.addf %174, %178 : vector<2x32xf32>
    %180 = vector.extract_strided_slice %169 {offsets = [4, 0], sizes = [2, 32], strides = [1, 1]} : vector<6x32xf32> to vector<2x32xf32>
    %181 = vector.extract_strided_slice %170 {offsets = [64, 0], sizes = [32, 32], strides = [1, 1]} : vector<96x32xbf16> to vector<32x32xbf16>
    %182 = arith.truncf %180 : vector<2x32xf32> to vector<2x32xbf16>
    %cst_73 = arith.constant dense<0.000000e+00> : vector<2x32xf32>
    %183 = tpu.matmul %182, %181, %cst_73 {dimension_numbers = #tpu.dot_dimension_numbers<[1], [0], [0], [1], [0, 0, 1, 1], [], []>} : vector<2x32xbf16>, vector<32x32xbf16>, vector<2x32xf32> -> vector<2x32xf32>
    %184 = arith.addf %179, %183 : vector<2x32xf32>
    %c0_74 = arith.constant 0 : index
    %c0_75 = arith.constant 0 : index
    %185 = vector.load %arg20[%c0_74, %c0_75] : memref<1x32xf32, #tpu.memory_space<vmem>>, vector<1x32xf32>
    %186 = vector.broadcast %185 : vector<1x32xf32> to vector<2x32xf32>
    %187 = arith.addf %184, %186 : vector<2x32xf32>
    %188 = arith.mulf %187, %187 : vector<2x32xf32>
    %189 = arith.mulf %187, %188 : vector<2x32xf32>
    %cst_76 = arith.constant 4.471500e-02 : f32
    %190 = vector.broadcast %cst_76 : f32 to vector<2x32xf32>
    %191 = arith.mulf %190, %189 : vector<2x32xf32>
    %192 = arith.addf %187, %191 : vector<2x32xf32>
    %cst_77 = arith.constant 0.797884583 : f32
    %193 = vector.broadcast %cst_77 : f32 to vector<2x32xf32>
    %194 = arith.mulf %193, %192 : vector<2x32xf32>
    %195 = math.tanh %194 : vector<2x32xf32>
    %cst_78 = arith.constant 1.000000e+00 : f32
    %196 = vector.broadcast %cst_78 : f32 to vector<2x32xf32>
    %197 = arith.addf %196, %195 : vector<2x32xf32>
    %cst_79 = arith.constant 5.000000e-01 : f32
    %198 = vector.broadcast %cst_79 : f32 to vector<2x32xf32>
    %199 = arith.mulf %198, %197 : vector<2x32xf32>
    %200 = arith.mulf %187, %199 : vector<2x32xf32>
    %c0_80 = arith.constant 0 : index
    %c0_81 = arith.constant 0 : index
    %201 = vector.load %arg21[%c0_80, %c0_81] : memref<32x1xbf16, #tpu.memory_space<vmem>>, vector<32x1xbf16>
    %202 = arith.truncf %200 : vector<2x32xf32> to vector<2x32xbf16>
    %cst_82 = arith.constant dense<0.000000e+00> : vector<2x1xf32>
    %203 = tpu.matmul %202, %201, %cst_82 {dimension_numbers = #tpu.dot_dimension_numbers<[1], [0], [0], [1], [0, 0, 1, 1], [], []>} : vector<2x32xbf16>, vector<32x1xbf16>, vector<2x1xf32> -> vector<2x1xf32>
    %c0_83 = arith.constant 0 : index
    %c0_84 = arith.constant 0 : index
    %204 = vector.load %arg22[%c0_83, %c0_84] : memref<1x1xf32, #tpu.memory_space<vmem>>, vector<1x1xf32>
    %205 = vector.broadcast %204 : vector<1x1xf32> to vector<2x1xf32>
    %206 = arith.addf %203, %205 : vector<2x1xf32>
    %c0_85 = arith.constant 0 : index
    %c0_86 = arith.constant 0 : index
    %207 = vector.load %arg23[%c0_85, %c0_86] : memref<2x1xf32, #tpu.memory_space<vmem>>, vector<2x1xf32>
    tpu.vector_store %arg23[%c0_85, %c0_86], %206 {strides = array<i32>} : memref<2x1xf32, #tpu.memory_space<vmem>>, vector<2x1xf32>,
    return
  }
}

</mosaic_0001>

<llo_original>
// kernel: mul.19
$region0: #{mul.19}
  %s0 = inlined_call_operand.vmem [shape: f32[3,16], index: 0, kind: input, shape index: {}]
  %s1 = inlined_call_operand.vmem [shape: f32[48], index: 1, kind: output, shape index: {}]
  $region1: #{mul.19} parent=0
    #allocation0 [shape = 'u8[4096]{0}', space=vmem, size = 0x1000, scoped, tag = 'scoped mem for output reshape']
    #allocation1 [shape = 'u8[4096]{0}', space=vmem, size = 0x1000, scoped, tag = 'scoped mem for input reshape']
    %s3 = sshll.u32 1, 4
    %s4 = ssub.s32 %s3, 1
    %v5 = vld [vmem:[%s0] sm:%s4]
    %6 = vst [vmem:[#allocation1] sm:%s4] %v5
    %v7 = vld [vmem:[#allocation1] sm:$0x1]
    %vm8 = vcmask 130048
    %9 = vst.msk [vmem:[#allocation0] sm:$0x1] %vm8, %v7
    %s10 = scalar_lea.vmem [#allocation1], 2
    %v11 = vld [vmem:[%s10] sm:$0x1]
    %12 = vrot.lane.b32.xlu0 %v11, 32
    %v13 = vpop.permute.xlu0 %12
    %vm14 = vcmask 392448
    %15 = vst.msk [vmem:[#allocation0] sm:$0x1] %vm14, %v13
    %s16 = scalar_lea.vmem [#allocation1], 1
    %v17 = vld [vmem:[%s16] sm:$0x1]
    %18 = vrot.lane.b32.xlu0 %v17, 16
    %v19 = vpop.permute.xlu0 %18
    %vm20 = vcmask 261248
    %21 = vst.msk [vmem:[#allocation0] sm:$0x1] %vm20, %v19
    %s23 = sshll.u32 1, 1
    %s24 = ssub.s32 %s23, 1
    %v26 = vld [vmem:[#allocation0] sm:%s24]
    %s27 = sshll.u32 1, 1
    %s28 = ssub.s32 %s27, 1
    %29 = vst [vmem:[%s1] sm:%s28] %v26

// kernel: mfvit_forward.1
$region0: #{mfvit_forward.1}
  #allocation0 [shape = 'u32[]', space=smem, size = 0x4, offset = 0x4, fixed_abs, tag = 'smem constant byte address 0x4 - core index']
  #allocation1 [shape = 'u32[144,128]{1,0:T(1,128)}', space=vmem, size = 0x12000, scoped, tag = 'internal scratch']
  #allocation2 [shape = 'f32[1,1]{1,0:T(1,128)S(1)}', space=vmem, size = 0x200, scoped, tag = 'scoped memory for mfvit_forward.1']
  %s0 = inlined_call_operand.vmem [shape: f32[96,48], index: 0, kind: input, shape index: {}]
  %s1 = inlined_call_operand.vmem [shape: f32[102,32], index: 1, kind: input, shape index: {}]
  %s2 = inlined_call_operand.vmem [shape: f32[6,102], index: 2, kind: input, shape index: {}]
  %s3 = inlined_call_operand.vmem [shape: bf16[48,32], index: 3, kind: input, shape index: {}]
  %s4 = inlined_call_operand.vmem [shape: f32[1,32], index: 4, kind: input, shape index: {}]
  %s5 = inlined_call_operand.vmem [shape: f32[1,32], index: 5, kind: input, shape index: {}]
  %s6 = inlined_call_operand.vmem [shape: f32[1,32], index: 6, kind: input, shape index: {}]
  %s7 = inlined_call_operand.vmem [shape: bf16[32,96], index: 7, kind: input, shape index: {}]
  %s8 = inlined_call_operand.vmem [shape: f32[1,96], index: 8, kind: input, shape index: {}]
  %s9 = inlined_call_operand.vmem [shape: bf16[32,32], index: 9, kind: input, shape index: {}]
  %s10 = inlined_call_operand.vmem [shape: f32[1,32], index: 10, kind: input, shape index: {}]
  %s11 = inlined_call_operand.vmem [shape: f32[1,32], index: 11, kind: input, shape index: {}]
  %s12 = inlined_call_operand.vmem [shape: f32[1,32], index: 12, kind: input, shape index: {}]
  %s13 = inlined_call_operand.vmem [shape: bf16[32,64], index: 13, kind: input, shape index: {}]
  %s14 = inlined_call_operand.vmem [shape: f32[1,64], index: 14, kind: input, shape index: {}]
  %s15 = inlined_call_operand.vmem [shape: bf16[64,32], index: 15, kind: input, shape index: {}]
  %s16 = inlined_call_operand.vmem [shape: f32[1,32], index: 16, kind: input, shape index: {}]
  %s17 = inlined_call_operand.vmem [shape: f32[1,32], index: 17, kind: input, shape index: {}]
  %s18 = inlined_call_operand.vmem [shape: f32[1,32], index: 18, kind: input, shape index: {}]
  %s19 = inlined_call_operand.vmem [shape: bf16[96,32], index: 19, kind: input, shape index: {}]
  %s20 = inlined_call_operand.vmem [shape: f32[1,32], index: 20, kind: input, shape index: {}]
  %s21 = inlined_call_operand.vmem [shape: bf16[32,1], index: 21, kind: input, shape index: {}]
  %s22 = inlined_call_operand.<no memory space> [shape: f32[1,1], index: 22, kind: input, shape index: {}]
  %s23 = inlined_call_operand.vmem [shape: f32[2,1], index: 23, kind: output, shape index: {}]
  %s24 = sld [smem:[#allocation0]]
  $region102: #{mfvit_forward.1} parent=0
    _
  %s26 = ssub.s32 1, %s24
  %s27 = scalar_select 0, %s26, %s24
  %v28 = vstv %s22
  %29 = vst [vmem:[#allocation2] sm:$0x1] %v28
  // Predicated region
  $region2: #{mfvit_forward.1} parent=0 // pred_check
    _
  $region3: #{mfvit_forward.1} parent=0 // pred_check_branch
    %31 = sbr.rel (0) target = $region5
  $region4: #{mfvit_forward.1} parent=0 // pred_region
    _
  $region5: #{mfvit_forward.1} parent=0 // pred_fallthru
    _
  // Predicated region
  $region6: #{mfvit_forward.1} parent=0 // pred_check
    _
  $region7: #{mfvit_forward.1} parent=0 // pred_check_branch
    %33 = sbr.rel (0) target = $region9
  $region8: #{mfvit_forward.1} parent=0 // pred_region
    _
  $region9: #{mfvit_forward.1} parent=0 // pred_fallthru
    _
  // Predicated region
  $region10: #{mfvit_forward.1} parent=0 // pred_check
    _
  $region11: #{mfvit_forward.1} parent=0 // pred_check_branch
    %35 = sbr.rel (0) target = $region13
  $region12: #{mfvit_forward.1} parent=0 // pred_region
    _
  $region13: #{mfvit_forward.1} parent=0 // pred_fallthru
    _
  // Predicated region
  $region14: #{mfvit_forward.1} parent=0 // pred_check
    _
  $region15: #{mfvit_forward.1} parent=0 // pred_check_branch
    %37 = sbr.rel (0) target = $region17
  $region16: #{mfvit_forward.1} parent=0 // pred_region
    _
  $region17: #{mfvit_forward.1} parent=0 // pred_fallthru
    _
  // Predicated region
  $region18: #{mfvit_forward.1} parent=0 // pred_check
    _
  $region19: #{mfvit_forward.1} parent=0 // pred_check_branch
    %39 = sbr.rel (0) target = $region21
  $region20: #{mfvit_forward.1} parent=0 // pred_region
    _
  $region21: #{mfvit_forward.1} parent=0 // pred_fallthru
    _
  // Predicated region
  $region22: #{mfvit_forward.1} parent=0 // pred_check
    _
  $region23: #{mfvit_forward.1} parent=0 // pred_check_branch
    %41 = sbr.rel (0) target = $region25
  $region24: #{mfvit_forward.1} parent=0 // pred_region
    _
  $region25: #{mfvit_forward.1} parent=0 // pred_fallthru
    _
  // Predicated region
  $region26: #{mfvit_forward.1} parent=0 // pred_check
    _
  $region27: #{mfvit_forward.1} parent=0 // pred_check_branch
    %43 = sbr.rel (0) target = $region29
  $region28: #{mfvit_forward.1} parent=0 // pred_region
    _
  $region29: #{mfvit_forward.1} parent=0 // pred_fallthru
    _
  // Predicated region
  $region30: #{mfvit_forward.1} parent=0 // pred_check
    _
  $region31: #{mfvit_forward.1} parent=0 // pred_check_branch
    %45 = sbr.rel (0) target = $region33
  $region32: #{mfvit_forward.1} parent=0 // pred_region
    _
  $region33: #{mfvit_forward.1} parent=0 // pred_fallthru
    _
  // Predicated region
  $region34: #{mfvit_forward.1} parent=0 // pred_check
    _
  $region35: #{mfvit_forward.1} parent=0 // pred_check_branch
    %47 = sbr.rel (0) target = $region37
  $region36: #{mfvit_forward.1} parent=0 // pred_region
    _
  $region37: #{mfvit_forward.1} parent=0 // pred_fallthru
    _
  // Predicated region
  $region38: #{mfvit_forward.1} parent=0 // pred_check
    _
  $region39: #{mfvit_forward.1} parent=0 // pred_check_branch
    %49 = sbr.rel (0) target = $region41
  $region40: #{mfvit_forward.1} parent=0 // pred_region
    _
  $region41: #{mfvit_forward.1} parent=0 // pred_fallthru
    _
  // Predicated region
  $region42: #{mfvit_forward.1} parent=0 // pred_check
    _
  $region43: #{mfvit_forward.1} parent=0 // pred_check_branch
    %51 = sbr.rel (0) target = $region45
  $region44: #{mfvit_forward.1} parent=0 // pred_region
    _
  $region45: #{mfvit_forward.1} parent=0 // pred_fallthru
    _
  // Predicated region
  $region46: #{mfvit_forward.1} parent=0 // pred_check
    _
  $region47: #{mfvit_forward.1} parent=0 // pred_check_branch
    %53 = sbr.rel (0) target = $region49
  $region48: #{mfvit_forward.1} parent=0 // pred_region
    _
  $region49: #{mfvit_forward.1} parent=0 // pred_fallthru
    _
  // Predicated region
  $region50: #{mfvit_forward.1} parent=0 // pred_check
    _
  $region51: #{mfvit_forward.1} parent=0 // pred_check_branch
    %55 = sbr.rel (0) target = $region53
  $region52: #{mfvit_forward.1} parent=0 // pred_region
    _
  $region53: #{mfvit_forward.1} parent=0 // pred_fallthru
    _
  // Predicated region
  $region54: #{mfvit_forward.1} parent=0 // pred_check
    _
  $region55: #{mfvit_forward.1} parent=0 // pred_check_branch
    %57 = sbr.rel (0) target = $region57
  $region56: #{mfvit_forward.1} parent=0 // pred_region
    _
  $region57: #{mfvit_forward.1} parent=0 // pred_fallthru
    _
  // Predicated region
  $region58: #{mfvit_forward.1} parent=0 // pred_check
    _
  $region59: #{mfvit_forward.1} parent=0 // pred_check_branch
    %59 = sbr.rel (0) target = $region61
  $region60: #{mfvit_forward.1} parent=0 // pred_region
    _
  $region61: #{mfvit_forward.1} parent=0 // pred_fallthru
    _
  // Predicated region
  $region62: #{mfvit_forward.1} parent=0 // pred_check
    _
  $region63: #{mfvit_forward.1} parent=0 // pred_check_branch
    %61 = sbr.rel (0) target = $region65
  $region64: #{mfvit_forward.1} parent=0 // pred_region
    _
  $region65: #{mfvit_forward.1} parent=0 // pred_fallthru
    _
  // Predicated region
  $region66: #{mfvit_forward.1} parent=0 // pred_check
    _
  $region67: #{mfvit_forward.1} parent=0 // pred_check_branch
    %63 = sbr.rel (0) target = $region69
  $region68: #{mfvit_forward.1} parent=0 // pred_region
    _
  $region69: #{mfvit_forward.1} parent=0 // pred_fallthru
    _
  // Predicated region
  $region70: #{mfvit_forward.1} parent=0 // pred_check
    _
  $region71: #{mfvit_forward.1} parent=0 // pred_check_branch
    %65 = sbr.rel (0) target = $region73
  $region72: #{mfvit_forward.1} parent=0 // pred_region
    _
  $region73: #{mfvit_forward.1} parent=0 // pred_fallthru
    _
  // Predicated region
  $region74: #{mfvit_forward.1} parent=0 // pred_check
    _
  $region75: #{mfvit_forward.1} parent=0 // pred_check_branch
    %67 = sbr.rel (0) target = $region77
  $region76: #{mfvit_forward.1} parent=0 // pred_region
    _
  $region77: #{mfvit_forward.1} parent=0 // pred_fallthru
    _
  // Predicated region
  $region78: #{mfvit_forward.1} parent=0 // pred_check
    _
  $region79: #{mfvit_forward.1} parent=0 // pred_check_branch
    %69 = sbr.rel (0) target = $region81
  $region80: #{mfvit_forward.1} parent=0 // pred_region
    _
  $region81: #{mfvit_forward.1} parent=0 // pred_fallthru
    _
  // Predicated region
  $region82: #{mfvit_forward.1} parent=0 // pred_check
    _
  $region83: #{mfvit_forward.1} parent=0 // pred_check_branch
    %71 = sbr.rel (0) target = $region85
  $region84: #{mfvit_forward.1} parent=0 // pred_region
    _
  $region85: #{mfvit_forward.1} parent=0 // pred_fallthru
    _
  // Predicated region
  $region86: #{mfvit_forward.1} parent=0 // pred_check
    _
  $region87: #{mfvit_forward.1} parent=0 // pred_check_branch
    %73 = sbr.rel (0) target = $region89
  $region88: #{mfvit_forward.1} parent=0 // pred_region
    _
  $region89: #{mfvit_forward.1} parent=0 // pred_fallthru
    _
  // Predicated region
  $region90: #{mfvit_forward.1} parent=0 // pred_check
    _
  $region91: #{mfvit_forward.1} parent=0 // pred_check_branch
    %75 = sbr.rel (0) target = $region93
  $region92: #{mfvit_forward.1} parent=0 // pred_region
    _
  $region93: #{mfvit_forward.1} parent=0 // pred_fallthru
    _
  %v77 = vld [vmem:[%s0] sm:$0xff]
  %v78 = vld [vmem:[%s0 + $0x8] sm:$0xff]
  %v79 = vld [vmem:[%s0 + $0x10] sm:$0xff]
  %v80 = vld [vmem:[%s0 + $0x18] sm:$0xff]
  %v81 = vld [vmem:[%s0 + $0x20] sm:$0xff]
  %v82 = vld [vmem:[%s0 + $0x28] sm:$0xff]
  %v83 = vld [vmem:[%s0 + $0x30] sm:$0xff]
  %v84 = vld [vmem:[%s0 + $0x38] sm:$0xff]
  %v85 = vld [vmem:[%s0 + $0x40] sm:$0xff]
  %v86 = vld [vmem:[%s0 + $0x48] sm:$0xff]
  %v87 = vld [vmem:[%s0 + $0x50] sm:$0xff]
  %v88 = vld [vmem:[%s0 + $0x58] sm:$0xff]
  %v89 = vld [vmem:[%s3] sm:$0xf]
  %v90 = vld [vmem:[%s3 + $0x4] sm:$0xf]
  %v91 = vld [vmem:[%s3 + $0x8] sm:$0xf]
  %v92 = vld [vmem:[%s3 + $0xc] sm:$0xf]
  %v93 = vld [vmem:[%s3 + $0x10] sm:$0xf]
  %v94 = vld [vmem:[%s3 + $0x14] sm:$0xf]
  %v95 = vpack.c.bf16 %v78, %v77
  %v96 = vpack.c.bf16 %v80, %v79
  %v97 = vpack.c.bf16 %v82, %v81
  %v98 = vpack.c.bf16 %v84, %v83
  %v99 = vpack.c.bf16 %v86, %v85
  %v100 = vpack.c.bf16 %v88, %v87
  %v101 = vld [vmem:[%s4] sm:$0x1]
  %v103 = vlaneseq
  %v104 = vshrl.u32 %v103, 7
  %v105 = vsub.s32 0, %v104
  %v106 = vrot.slane %v101, %v105
  %v114 = vunpack.c.l.b16 %v89
  %v115 = vunpack.c.l.b16 %v90
  %v116 = vunpack.c.l.b16 %v91
  %v117 = vunpack.c.l.b16 %v92
  %v118 = vunpack.c.l.b16 %v93
  %v119 = vunpack.c.l.b16 %v94
  %v120 = vpack.c.b16 %v115, %v114
  %v121 = vpack.c.b16 %v117, %v116
  %v122 = vpack.c.b16 %v119, %v118
  %vm126 = vcmask 392192
  %v128 = vsel %vm126, %v95, 0
  %v131 = vsel %vm126, %v96, 0
  %v134 = vsel %vm126, %v97, 0
  %v137 = vsel %vm126, %v98, 0
  %v140 = vsel %vm126, %v99, 0
  %v143 = vsel %vm126, %v100, 0
  %145 = vmatprep.subr.bf16.mxu0 0
  %146 = vmatpush1.bf16.msra.mxu0 0
  %147 = vmatprep.subr.bf16.mxu0 0
  %148 = vmatpush1.bf16.msra.mxu0 0
  %149 = vmatprep.subr.bf16.mxu0 0
  %150 = vmatpush1.bf16.msra.mxu0 0
  %151 = vmatprep.subr.bf16.mxu0 0
  %152 = vmatpush1.bf16.msra.mxu0 0
  %153 = vmatprep.subr.bf16.mxu0 0
  %154 = vmatpush1.bf16.msra.mxu0 0
  %155 = vmatprep.subr.bf16.mxu0 0
  %156 = vmatpush1.bf16.msra.mxu0 %v122
  %157 = vmatprep.subr.bf16.mxu0 0
  %158 = vmatpush1.bf16.msra.mxu0 %v121
  %159 = vmatprep.subr.bf16.mxu0 0
  %160 = vmatpush1.bf16.msra.mxu0 %v120
  %161 = vmatprep.subr.bf16.mxu0 0
  %162 = vmatpush2.bf16.msra.mxu0 0
  %163 = vmatprep.subr.bf16.mxu0 0
  %164 = vmatpush2.bf16.msra.mxu0 0
  %165 = vmatprep.subr.bf16.mxu0 0
  %166 = vmatpush2.bf16.msra.mxu0 0
  %167 = vmatprep.subr.bf16.mxu0 0
  %168 = vmatpush2.bf16.msra.mxu0 0
  %169 = vmatprep.subr.bf16.mxu0 0
  %170 = vmatpush2.bf16.msra.mxu0 0
  %171 = vmatprep.subr.bf16.mxu0 0
  %172 = vmatpush2.bf16.msra.mxu0 0
  %173 = vmatprep.subr.bf16.mxu0 0
  %174 = vmatpush2.bf16.msra.mxu0 0
  %175 = vmatprep.subr.bf16.mxu0 0
  %176 = vmatpush2.bf16.msra.mxu0 0
  %177 = vmatprep.mubr.bf16.mxu0 0
  %178 = vmatmul.mubr.bf16.gmra.mxu0 %v128
  %v179 = vpop.f32.mrf.mxu0
  %v180 = vadd.f32 %v106, %v179
  %v181 = vpop.f32.mrf.mxu0
  %v182 = vpop.f32.mrf.mxu0
  %v183 = vadd.f32 %v106, %v182
  %v184 = vpop.f32.mrf.mxu0
  %185 = vmatprep.mubr.bf16.mxu0 0
  %186 = vmatmul.mubr.bf16.gmra.mxu0 %v131
  %v187 = vpop.f32.mrf.mxu0
  %v188 = vadd.f32 %v106, %v187
  %v189 = vpop.f32.mrf.mxu0
  %v190 = vpop.f32.mrf.mxu0
  %v191 = vadd.f32 %v106, %v190
  %v192 = vpop.f32.mrf.mxu0
  %193 = vmatprep.mubr.bf16.mxu0 0
  %194 = vmatmul.mubr.bf16.gmra.mxu0 %v134
  %v195 = vpop.f32.mrf.mxu0
  %v196 = vadd.f32 %v106, %v195
  %v197 = vpop.f32.mrf.mxu0
  %v198 = vpop.f32.mrf.mxu0
  %v199 = vadd.f32 %v106, %v198
  %v200 = vpop.f32.mrf.mxu0
  %201 = vmatprep.mubr.bf16.mxu0 0
  %202 = vmatmul.mubr.bf16.gmra.mxu0 %v137
  %v203 = vpop.f32.mrf.mxu0
  %v204 = vadd.f32 %v106, %v203
  %v205 = vpop.f32.mrf.mxu0
  %v206 = vpop.f32.mrf.mxu0
  %v207 = vadd.f32 %v106, %v206
  %v208 = vpop.f32.mrf.mxu0
  %209 = vmatprep.mubr.bf16.mxu0 0
  %210 = vmatmul.mubr.bf16.gmra.mxu0 %v140
  %v211 = vpop.f32.mrf.mxu0
  %v212 = vadd.f32 %v106, %v211
  %v213 = vpop.f32.mrf.mxu0
  %v214 = vpop.f32.mrf.mxu0
  %v215 = vadd.f32 %v106, %v214
  %v216 = vpop.f32.mrf.mxu0
  %217 = vmatprep.mubr.bf16.mxu0 0
  %218 = vmatmul.mubr.bf16.gmra.mxu0 %v143
  %v219 = vpop.f32.mrf.mxu0
  %v220 = vadd.f32 %v106, %v219
  %v221 = vpop.f32.mrf.mxu0
  %v222 = vpop.f32.mrf.mxu0
  %v223 = vadd.f32 %v106, %v222
  %v224 = vpop.f32.mrf.mxu0
  %225 = vdwg.mxu0
  %v226 = vld [vmem:[%s1] sm:$0xff]
  %v227 = vld [vmem:[%s1 + $0x8] sm:$0xff]
  %v228 = vld [vmem:[%s1 + $0x10] sm:$0xff]
  %v229 = vld [vmem:[%s1 + $0x18] sm:$0xff]
  %v230 = vld [vmem:[%s1 + $0x20] sm:$0xff]
  %v231 = vld [vmem:[%s1 + $0x28] sm:$0xff]
  %v232 = vld [vmem:[%s1 + $0x30] sm:$0xff]
  %v233 = vld [vmem:[%s1 + $0x38] sm:$0xff]
  %v234 = vld [vmem:[%s1 + $0x40] sm:$0xff]
  %v235 = vld [vmem:[%s1 + $0x48] sm:$0xff]
  %v236 = vld [vmem:[%s1 + $0x50] sm:$0xff]
  %v237 = vld [vmem:[%s1 + $0x58] sm:$0xff]
  %v238 = vld [vmem:[%s1 + $0x60] sm:$0x3f]
  %vm252 = vcmask 1041408
  %v253 = vrot.slane %v226, 6
  %v254 = vrot.slane %v227, 6
  %v255 = vsel %vm252, %v253, %v254
  %v256 = vrot.slane %v228, 6
  %v257 = vsel %vm252, %v254, %v256
  %v258 = vrot.slane %v229, 6
  %v259 = vsel %vm252, %v256, %v258
  %v260 = vrot.slane %v230, 6
  %v261 = vsel %vm252, %v258, %v260
  %v262 = vrot.slane %v231, 6
  %v263 = vsel %vm252, %v260, %v262
  %v264 = vrot.slane %v232, 6
  %v265 = vsel %vm252, %v262, %v264
  %v266 = vrot.slane %v233, 6
  %v267 = vsel %vm252, %v264, %v266
  %v268 = vrot.slane %v234, 6
  %v269 = vsel %vm252, %v266, %v268
  %v270 = vrot.slane %v235, 6
  %v271 = vsel %vm252, %v268, %v270
  %v272 = vrot.slane %v236, 6
  %v273 = vsel %vm252, %v270, %v272
  %v274 = vrot.slane %v237, 6
  %v275 = vsel %vm252, %v272, %v274
  %v276 = vrot.slane %v238, 6
  %v277 = vsel %vm252, %v274, %v276
  %v290 = vadd.f32 %v180, %v255
  %v291 = vadd.f32 %v183, %v257
  %v292 = vadd.f32 %v188, %v259
  %v293 = vadd.f32 %v191, %v261
  %v294 = vadd.f32 %v196, %v263
  %v295 = vadd.f32 %v199, %v265
  %v296 = vadd.f32 %v204, %v267
  %v297 = vadd.f32 %v207, %v269
  %v298 = vadd.f32 %v212, %v271
  %v299 = vadd.f32 %v215, %v273
  %v300 = vadd.f32 %v220, %v275
  %v301 = vadd.f32 %v223, %v277
  %vm314 = vcmask 1045504
  %v315 = vrot.slane %v290, 2
  %v316 = vrot.slane %v291, 2
  %v317 = vsel %vm314, %v315, %v316
  %v318 = vrot.slane %v292, 2
  %v319 = vsel %vm314, %v316, %v318
  %v320 = vrot.slane %v293, 2
  %v321 = vsel %vm314, %v318, %v320
  %v322 = vrot.slane %v294, 2
  %v323 = vsel %vm314, %v320, %v322
  %v324 = vrot.slane %v295, 2
  %v325 = vsel %vm314, %v322, %v324
  %v326 = vrot.slane %v296, 2
  %v327 = vsel %vm314, %v324, %v326
  %v328 = vrot.slane %v297, 2
  %v329 = vsel %vm314, %v326, %v328
  %v330 = vrot.slane %v298, 2
  %v331 = vsel %vm314, %v328, %v330
  %v332 = vrot.slane %v299, 2
  %v333 = vsel %vm314, %v330, %v332
  %v334 = vrot.slane %v300, 2
  %v335 = vsel %vm314, %v332, %v334
  %v336 = vrot.slane %v301, 2
  %v337 = vsel %vm314, %v334, %v336
  %v351 = vsel %vm314, %v226, %v315
  %v352 = vld [vmem:[%s5] sm:$0x1]
  %v353 = vld [vmem:[%s6] sm:$0x1]
  %vm354 = vcmask 261120
  %v355 = vsel %vm354, %v351, 0.0
  %356 = vadd.xlane.f32.xlu0 %v355
  %v357 = vpop.xlane.xlu0 %356
  %v358 = vsel %vm354, %v317, 0.0
  %359 = vadd.xlane.f32.xlu0 %v358
  %v360 = vpop.xlane.xlu0 %359
  %v361 = vsel %vm354, %v319, 0.0
  %362 = vadd.xlane.f32.xlu0 %v361
  %v363 = vpop.xlane.xlu0 %362
  %v364 = vsel %vm354, %v321, 0.0
  %365 = vadd.xlane.f32.xlu0 %v364
  %v366 = vpop.xlane.xlu0 %365
  %v367 = vsel %vm354, %v323, 0.0
  %368 = vadd.xlane.f32.xlu0 %v367
  %v369 = vpop.xlane.xlu0 %368
  %v370 = vsel %vm354, %v325, 0.0
  %371 = vadd.xlane.f32.xlu0 %v370
  %v372 = vpop.xlane.xlu0 %371
  %v373 = vsel %vm354, %v327, 0.0
  %374 = vadd.xlane.f32.xlu0 %v373
  %v375 = vpop.xlane.xlu0 %374
  %v376 = vsel %vm354, %v329, 0.0
  %377 = vadd.xlane.f32.xlu0 %v376
  %v378 = vpop.xlane.xlu0 %377
  %v379 = vsel %vm354, %v331, 0.0
  %380 = vadd.xlane.f32.xlu0 %v379
  %v381 = vpop.xlane.xlu0 %380
  %v382 = vsel %vm354, %v333, 0.0
  %383 = vadd.xlane.f32.xlu0 %v382
  %v384 = vpop.xlane.xlu0 %383
  %v385 = vsel %vm354, %v335, 0.0
  %386 = vadd.xlane.f32.xlu0 %v385
  %v387 = vpop.xlane.xlu0 %386
  %v388 = vsel %vm354, %v337, 0.0
  %389 = vadd.xlane.f32.xlu0 %v388
  %v390 = vpop.xlane.xlu0 %389
  %vm391 = vcmask 259072
  %v392 = vsel %vm391, %v336, 0.0
  %393 = vadd.xlane.f32.xlu0 %v392
  %v394 = vpop.xlane.xlu0 %393
  %v395 = vrcp.pop 32.0
  %v396 = vmul.f32 %v357, %v395
  %v397 = vmul.f32 %v360, %v395
  %v398 = vmul.f32 %v363, %v395
  %v399 = vmul.f32 %v366, %v395
  %v400 = vmul.f32 %v369, %v395
  %v401 = vmul.f32 %v372, %v395
  %v402 = vmul.f32 %v375, %v395
  %v403 = vmul.f32 %v378, %v395
  %v404 = vmul.f32 %v381, %v395
  %v405 = vmul.f32 %v384, %v395
  %v406 = vmul.f32 %v387, %v395
  %v407 = vmul.f32 %v390, %v395
  %v408 = vmul.f32 %v394, %v395
  %v409 = vsub.f32 %v351, %v396
  %v410 = vsub.f32 %v317, %v397
  %v411 = vsub.f32 %v319, %v398
  %v412 = vsub.f32 %v321, %v399
  %v413 = vsub.f32 %v323, %v400
  %v414 = vsub.f32 %v325, %v401
  %v415 = vsub.f32 %v327, %v402
  %v416 = vsub.f32 %v329, %v403
  %v417 = vsub.f32 %v331, %v404
  %v418 = vsub.f32 %v333, %v405
  %v419 = vsub.f32 %v335, %v406
  %v420 = vsub.f32 %v337, %v407
  %v421 = vsub.f32 %v336, %v408
  %v422 = vmul.f32 %v409, %v409
  %v423 = vmul.f32 %v410, %v410
  %v424 = vmul.f32 %v411, %v411
  %v425 = vmul.f32 %v412, %v412
  %v426 = vmul.f32 %v413, %v413
  %v427 = vmul.f32 %v414, %v414
  %v428 = vmul.f32 %v415, %v415
  %v429 = vmul.f32 %v416, %v416
  %v430 = vmul.f32 %v417, %v417
  %v431 = vmul.f32 %v418, %v418
  %v432 = vmul.f32 %v419, %v419
  %v433 = vmul.f32 %v420, %v420
  %v434 = vmul.f32 %v421, %v421
  %v435 = vsel %vm354, %v422, 0.0
  %436 = vadd.xlane.f32.xlu0 %v435
  %v437 = vpop.xlane.xlu0 %436
  %v438 = vsel %vm354, %v423, 0.0
  %439 = vadd.xlane.f32.xlu0 %v438
  %v440 = vpop.xlane.xlu0 %439
  %v441 = vsel %vm354, %v424, 0.0
  %442 = vadd.xlane.f32.xlu0 %v441
  %v443 = vpop.xlane.xlu0 %442
  %v444 = vsel %vm354, %v425, 0.0
  %445 = vadd.xlane.f32.xlu0 %v444
  %v446 = vpop.xlane.xlu0 %445
  %v447 = vsel %vm354, %v426, 0.0
  %448 = vadd.xlane.f32.xlu0 %v447
  %v449 = vpop.xlane.xlu0 %448
  %v450 = vsel %vm354, %v427, 0.0
  %451 = vadd.xlane.f32.xlu0 %v450
  %v452 = vpop.xlane.xlu0 %451
  %v453 = vsel %vm354, %v428, 0.0
  %454 = vadd.xlane.f32.xlu0 %v453
  %v455 = vpop.xlane.xlu0 %454
  %v456 = vsel %vm354, %v429, 0.0
  %457 = vadd.xlane.f32.xlu0 %v456
  %v458 = vpop.xlane.xlu0 %457
  %v459 = vsel %vm354, %v430, 0.0
  %460 = vadd.xlane.f32.xlu0 %v459
  %v461 = vpop.xlane.xlu0 %460
  %v462 = vsel %vm354, %v431, 0.0
  %463 = vadd.xlane.f32.xlu0 %v462
  %v464 = vpop.xlane.xlu0 %463
  %v465 = vsel %vm354, %v432, 0.0
  %466 = vadd.xlane.f32.xlu0 %v465
  %v467 = vpop.xlane.xlu0 %466
  %v468 = vsel %vm354, %v433, 0.0
  %469 = vadd.xlane.f32.xlu0 %v468
  %v470 = vpop.xlane.xlu0 %469
  %v471 = vsel %vm391, %v434, 0.0
  %472 = vadd.xlane.f32.xlu0 %v471
  %v473 = vpop.xlane.xlu0 %472
  %v474 = vmul.f32 %v437, %v395
  %v475 = vmul.f32 %v440, %v395
  %v476 = vmul.f32 %v443, %v395
  %v477 = vmul.f32 %v446, %v395
  %v478 = vmul.f32 %v449, %v395
  %v479 = vmul.f32 %v452, %v395
  %v480 = vmul.f32 %v455, %v395
  %v481 = vmul.f32 %v458, %v395
  %v482 = vmul.f32 %v461, %v395
  %v483 = vmul.f32 %v464, %v395
  %v484 = vmul.f32 %v467, %v395
  %v485 = vmul.f32 %v470, %v395
  %v486 = vmul.f32 %v473, %v395
  %v487 = vadd.f32 %v474, 1e-06
  %v488 = vadd.f32 %v475, 1e-06
  %v489 = vadd.f32 %v476, 1e-06
  %v490 = vadd.f32 %v477, 1e-06
  %v491 = vadd.f32 %v478, 1e-06
  %v492 = vadd.f32 %v479, 1e-06
  %v493 = vadd.f32 %v480, 1e-06
  %v494 = vadd.f32 %v481, 1e-06
  %v495 = vadd.f32 %v482, 1e-06
  %v496 = vadd.f32 %v483, 1e-06
  %v497 = vadd.f32 %v484, 1e-06
  %v498 = vadd.f32 %v485, 1e-06
  %v499 = vadd.f32 %v486, 1e-06
  %v500 = vrsqrt.pop %v487
  %v501 = vrsqrt.pop %v488
  %v502 = vrsqrt.pop %v489
  %v503 = vrsqrt.pop %v490
  %v504 = vrsqrt.pop %v491
  %v505 = vrsqrt.pop %v492
  %v506 = vrsqrt.pop %v493
  %v507 = vrsqrt.pop %v494
  %v508 = vrsqrt.pop %v495
  %v509 = vrsqrt.pop %v496
  %v510 = vrsqrt.pop %v497
  %v511 = vrsqrt.pop %v498
  %v512 = vrsqrt.pop %v499
  %v513 = vmul.f32 %v409, %v500
  %v514 = vmul.f32 %v410, %v501
  %v515 = vmul.f32 %v411, %v502
  %v516 = vmul.f32 %v412, %v503
  %v517 = vmul.f32 %v413, %v504
  %v518 = vmul.f32 %v414, %v505
  %v519 = vmul.f32 %v415, %v506
  %v520 = vmul.f32 %v416, %v507
  %v521 = vmul.f32 %v417, %v508
  %v522 = vmul.f32 %v418, %v509
  %v523 = vmul.f32 %v419, %v510
  %v524 = vmul.f32 %v420, %v511
  %v525 = vmul.f32 %v421, %v512
  %v527 = vlaneseq
  %v528 = vshrl.u32 %v527, 7
  %v529 = vsub.s32 0, %v528
  %v530 = vrot.slane %v352, %v529
  %v532 = vmul.f32 %v513, %v530
  %v533 = vmul.f32 %v514, %v530
  %v534 = vmul.f32 %v515, %v530
  %v535 = vmul.f32 %v516, %v530
  %v536 = vmul.f32 %v517, %v530
  %v537 = vmul.f32 %v518, %v530
  %v538 = vmul.f32 %v519, %v530
  %v539 = vmul.f32 %v520, %v530
  %v540 = vmul.f32 %v521, %v530
  %v541 = vmul.f32 %v522, %v530
  %v542 = vmul.f32 %v523, %v530
  %v543 = vmul.f32 %v524, %v530
  %v544 = vmul.f32 %v525, %v530
  %v546 = vlaneseq
  %v547 = vshrl.u32 %v546, 7
  %v548 = vsub.s32 0, %v547
  %v549 = vrot.slane %v353, %v548
  %v551 = vadd.f32 %v532, %v549
  %v552 = vadd.f32 %v533, %v549
  %v553 = vadd.f32 %v534, %v549
  %v554 = vadd.f32 %v535, %v549
  %v555 = vadd.f32 %v536, %v549
  %v556 = vadd.f32 %v537, %v549
  %v557 = vadd.f32 %v538, %v549
  %v558 = vadd.f32 %v539, %v549
  %v559 = vadd.f32 %v540, %v549
  %v560 = vadd.f32 %v541, %v549
  %v561 = vadd.f32 %v542, %v549
  %v562 = vadd.f32 %v543, %v549
  %v563 = vadd.f32 %v544, %v549
  %v564 = vld [vmem:[%s7] sm:$0xf]
  %v565 = vld [vmem:[%s7 + $0x4] sm:$0xf]
  %v566 = vld [vmem:[%s7 + $0x8] sm:$0xf]
  %v567 = vld [vmem:[%s7 + $0xc] sm:$0xf]
  %v568 = vpack.c.bf16 %v552, %v551
  %v569 = vpack.c.bf16 %v554, %v553
  %v570 = vpack.c.bf16 %v556, %v555
  %v571 = vpack.c.bf16 %v558, %v557
  %v572 = vpack.c.bf16 %v560, %v559
  %v573 = vpack.c.bf16 %v562, %v561
  %v574 = vpack.c.bf16 %v563, %v563
  %v575 = vld [vmem:[%s8] sm:$0x1]
  %v577 = vlaneseq
  %v578 = vshrl.u32 %v577, 7
  %v579 = vsub.s32 0, %v578
  %v580 = vrot.slane %v575, %v579
  %v586 = vunpack.c.l.b16 %v564
  %v587 = vunpack.c.l.b16 %v565
  %v588 = vunpack.c.l.b16 %v566
  %v589 = vunpack.c.l.b16 %v567
  %v590 = vpack.c.b16 %v587, %v586
  %v591 = vpack.c.b16 %v589, %v588
  %v595 = vsel %vm354, %v568, 0
  %v598 = vsel %vm354, %v569, 0
  %v601 = vsel %vm354, %v570, 0
  %v604 = vsel %vm354, %v571, 0
  %v607 = vsel %vm354, %v572, 0
  %v610 = vsel %vm354, %v573, 0
  %v613 = vsel %vm354, %v574, 0
  %615 = vmatprep.subr.bf16.mxu0 0
  %616 = vmatpush1.bf16.msra.mxu0 0
  %617 = vmatprep.subr.bf16.mxu0 0
  %618 = vmatpush1.bf16.msra.mxu0 0
  %619 = vmatprep.subr.bf16.mxu0 0
  %620 = vmatpush1.bf16.msra.mxu0 0
  %621 = vmatprep.subr.bf16.mxu0 0
  %622 = vmatpush1.bf16.msra.mxu0 0
  %623 = vmatprep.subr.bf16.mxu0 0
  %624 = vmatpush1.bf16.msra.mxu0 0
  %625 = vmatprep.subr.bf16.mxu0 0
  %626 = vmatpush1.bf16.msra.mxu0 0
  %627 = vmatprep.subr.bf16.mxu0 0
  %628 = vmatpush1.bf16.msra.mxu0 %v591
  %629 = vmatprep.subr.bf16.mxu0 0
  %630 = vmatpush1.bf16.msra.mxu0 %v590
  %631 = vmatprep.subr.bf16.mxu0 0
  %632 = vmatpush2.bf16.msra.mxu0 0
  %633 = vmatprep.subr.bf16.mxu0 0
  %634 = vmatpush2.bf16.msra.mxu0 0
  %635 = vmatprep.subr.bf16.mxu0 0
  %636 = vmatpush2.bf16.msra.mxu0 0
  %637 = vmatprep.subr.bf16.mxu0 0
  %638 = vmatpush2.bf16.msra.mxu0 0
  %639 = vmatprep.subr.bf16.mxu0 0
  %640 = vmatpush2.bf16.msra.mxu0 0
  %641 = vmatprep.subr.bf16.mxu0 0
  %642 = vmatpush2.bf16.msra.mxu0 0
  %643 = vmatprep.subr.bf16.mxu0 0
  %644 = vmatpush2.bf16.msra.mxu0 0
  %645 = vmatprep.subr.bf16.mxu0 0
  %646 = vmatpush2.bf16.msra.mxu0 0
  %647 = vmatprep.mubr.bf16.mxu0 0
  %648 = vmatmul.mubr.bf16.gmra.mxu0 %v595
  %v649 = vpop.f32.mrf.mxu0
  %v650 = vadd.f32 %v580, %v649
  %v651 = vpop.f32.mrf.mxu0
  %v652 = vpop.f32.mrf.mxu0
  %v653 = vadd.f32 %v580, %v652
  %v654 = vpop.f32.mrf.mxu0
  %655 = vmatprep.mubr.bf16.mxu0 0
  %656 = vmatmul.mubr.bf16.gmra.mxu0 %v598
  %v657 = vpop.f32.mrf.mxu0
  %v658 = vadd.f32 %v580, %v657
  %v659 = vpop.f32.mrf.mxu0
  %v660 = vpop.f32.mrf.mxu0
  %v661 = vadd.f32 %v580, %v660
  %v662 = vpop.f32.mrf.mxu0
  %663 = vmatprep.mubr.bf16.mxu0 0
  %664 = vmatmul.mubr.bf16.gmra.mxu0 %v601
  %v665 = vpop.f32.mrf.mxu0
  %v666 = vadd.f32 %v580, %v665
  %v667 = vpop.f32.mrf.mxu0
  %v668 = vpop.f32.mrf.mxu0
  %v669 = vadd.f32 %v580, %v668
  %v670 = vpop.f32.mrf.mxu0
  %671 = vmatprep.mubr.bf16.mxu0 0
  %672 = vmatmul.mubr.bf16.gmra.mxu0 %v604
  %v673 = vpop.f32.mrf.mxu0
  %v674 = vadd.f32 %v580, %v673
  %v675 = vpop.f32.mrf.mxu0
  %v676 = vpop.f32.mrf.mxu0
  %v677 = vadd.f32 %v580, %v676
  %v678 = vpop.f32.mrf.mxu0
  %679 = vmatprep.mubr.bf16.mxu0 0
  %680 = vmatmul.mubr.bf16.gmra.mxu0 %v607
  %v681 = vpop.f32.mrf.mxu0
  %v682 = vadd.f32 %v580, %v681
  %v683 = vpop.f32.mrf.mxu0
  %v684 = vpop.f32.mrf.mxu0
  %v685 = vadd.f32 %v580, %v684
  %v686 = vpop.f32.mrf.mxu0
  %687 = vmatprep.mubr.bf16.mxu0 0
  %688 = vmatmul.mubr.bf16.gmra.mxu0 %v610
  %v689 = vpop.f32.mrf.mxu0
  %v690 = vadd.f32 %v580, %v689
  %v691 = vpop.f32.mrf.mxu0
  %v692 = vpop.f32.mrf.mxu0
  %v693 = vadd.f32 %v580, %v692
  %v694 = vpop.f32.mrf.mxu0
  %695 = vmatprep.mubr.bf16.mxu0 0
  %696 = vmatmul.mubr.bf16.gmra.mxu0 %v613
  %v697 = vpop.f32.mrf.mxu0
  %v698 = vadd.f32 %v580, %v697
  %v699 = vpop.f32.mrf.mxu0
  %v700 = vpop.f32.mrf.mxu0
  %v701 = vpop.f32.mrf.mxu0
  %702 = vdwg.mxu0
  %v703 = vld [vmem:[%s2] sm:$0x3f]
  %v704 = vld [vmem:[%s9] sm:$0xf]
  %v705 = vld [vmem:[%s9 + $0x4] sm:$0xf]
  %v706 = vld [vmem:[%s9 + $0x8] sm:$0xf]
  %v707 = vld [vmem:[%s9 + $0xc] sm:$0xf]
  %v708 = vpack.c.bf16 %v650, %v650
  %v709 = vpack.c.bf16 %v653, %v650
  %v710 = vpack.c.bf16 %v661, %v658
  %v711 = vpack.c.bf16 %v669, %v666
  %v712 = vpack.c.bf16 %v677, %v674
  %v713 = vpack.c.bf16 %v685, %v682
  %v714 = vpack.c.bf16 %v693, %v690
  %v715 = vpack.c.bf16 %v698, %v698
  %723 = vrot.lane.b32.xlu0 %v709, 96
  %v724 = vpop.permute.xlu0 %723
  %725 = vrot.lane.b32.xlu0 %v710, 96
  %v726 = vpop.permute.xlu0 %725
  %727 = vrot.lane.b32.xlu0 %v711, 96
  %v728 = vpop.permute.xlu0 %727
  %729 = vrot.lane.b32.xlu0 %v712, 96
  %v730 = vpop.permute.xlu0 %729
  %731 = vrot.lane.b32.xlu0 %v713, 96
  %v732 = vpop.permute.xlu0 %731
  %733 = vrot.lane.b32.xlu0 %v714, 96
  %v734 = vpop.permute.xlu0 %733
  %735 = vrot.lane.b32.xlu0 %v715, 96
  %v736 = vpop.permute.xlu0 %735
  %vm737 = vcmask 130048
  %v739 = vsel %vm737, %v708, 0
  %v742 = vsel %vm737, %v724, 0
  %v745 = vsel %vm737, %v726, 0
  %v748 = vsel %vm737, %v728, 0
  %v751 = vsel %vm737, %v730, 0
  %v754 = vsel %vm737, %v732, 0
  %v757 = vsel %vm737, %v734, 0
  %v760 = vsel %vm737, %v736, 0
  %762 = vmatprep.subr.bf16.mxu0 0
  %763 = vmatpush1.bf16.xpose.msra.mxu0 0
  %764 = vmatprep.subr.bf16.mxu0 0
  %765 = vmatpush1.bf16.xpose.msra.mxu0 %v760
  %766 = vmatprep.subr.bf16.mxu0 0
  %767 = vmatpush1.bf16.xpose.msra.mxu0 %v757
  %768 = vmatprep.subr.bf16.mxu0 0
  %769 = vmatpush1.bf16.xpose.msra.mxu0 %v754
  %770 = vmatprep.subr.bf16.mxu0 0
  %771 = vmatpush1.bf16.xpose.msra.mxu0 %v751
  %772 = vmatprep.subr.bf16.mxu0 0
  %773 = vmatpush1.bf16.xpose.msra.mxu0 %v748
  %774 = vmatprep.subr.bf16.mxu0 0
  %775 = vmatpush1.bf16.xpose.msra.mxu0 %v745
  %776 = vmatprep.subr.bf16.mxu0 0
  %777 = vmatpush1.bf16.xpose.msra.mxu0 %v742
  %778 = vmatprep.subr.bf16.mxu0 0
  %779 = vmatpush2.bf16.xpose.msra.mxu0 0
  %780 = vmatprep.subr.bf16.mxu0 0
  %781 = vmatpush2.bf16.xpose.msra.mxu0 0
  %782 = vmatprep.subr.bf16.mxu0 0
  %783 = vmatpush2.bf16.xpose.msra.mxu0 0
  %784 = vmatprep.subr.bf16.mxu0 0
  %785 = vmatpush2.bf16.xpose.msra.mxu0 0
  %786 = vmatprep.subr.bf16.mxu0 0
  %787 = vmatpush2.bf16.xpose.msra.mxu0 0
  %788 = vmatprep.subr.bf16.mxu0 0
  %789 = vmatpush2.bf16.xpose.msra.mxu0 0
  %790 = vmatprep.subr.bf16.mxu0 0
  %791 = vmatpush2.bf16.xpose.msra.mxu0 0
  %792 = vmatprep.subr.bf16.mxu0 0
  %793 = vmatpush2.bf16.xpose.msra.mxu0 0
  %794 = vmatprep.mubr.bf16.mxu0 0
  %795 = vmatmul.mubr.bf16.gmra.mxu0 %v739
  %v796 = vpop.f32.mrf.mxu0
  %v797 = vadd.f32 %v703, %v796
  %v798 = vpop.f32.mrf.mxu0
  %v799 = vpop.f32.mrf.mxu0
  %v800 = vpop.f32.mrf.mxu0
  %801 = vdwg.mxu0
  %vm802 = vcmask 832512
  %v803 = vsel %vm802, %v797, -inf
  %804 = vmax.xlane.f32.xlu0 %v803
  %v805 = vpop.xlane.xlu0 %804
  %v806 = vsub.f32 %v797, %v805
  %v807 = vmul.f32 %v806, 1.442695
  %v808 = vpow.pop %v807
  %v809 = vsel %vm802, %v808, 0.0
  %810 = vadd.xlane.f32.xlu0 %v809
  %v811 = vpop.xlane.xlu0 %810
  %v812 = vrcp.pop %v811
  %v813 = vmul.f32 %v808, %v812
  %v814 = vpack.c.bf16 %v813, %v813
  %815 = vrot.lane.b32.xlu0 %v709, 64
  %v816 = vpop.permute.xlu0 %815
  %817 = vrot.lane.b32.xlu0 %v710, 64
  %v818 = vpop.permute.xlu0 %817
  %819 = vrot.lane.b32.xlu0 %v711, 64
  %v820 = vpop.permute.xlu0 %819
  %821 = vrot.lane.b32.xlu0 %v712, 64
  %v822 = vpop.permute.xlu0 %821
  %823 = vrot.lane.b32.xlu0 %v713, 64
  %v824 = vpop.permute.xlu0 %823
  %825 = vrot.lane.b32.xlu0 %v714, 64
  %v826 = vpop.permute.xlu0 %825
  %827 = vrot.lane.b32.xlu0 %v715, 64
  %v828 = vpop.permute.xlu0 %827
  %vm835 = vcmask 834560
  %v837 = vsel %vm835, %v814, 0
  %vm839 = vcmask 1042432
  %v841 = vsel %vm839, %v828, 0
  %843 = vmatprep.subr.bf16.mxu0 0
  %844 = vmatpush1.bf16.msra.mxu0 0
  %845 = vmatprep.subr.bf16.mxu0 0
  %846 = vmatpush1.bf16.msra.mxu0 %v841
  %847 = vmatprep.subr.bf16.mxu0 0
  %848 = vmatpush1.bf16.msra.mxu0 %v826
  %849 = vmatprep.subr.bf16.mxu0 0
  %850 = vmatpush1.bf16.msra.mxu0 %v824
  %851 = vmatprep.subr.bf16.mxu0 0
  %852 = vmatpush1.bf16.msra.mxu0 %v822
  %853 = vmatprep.subr.bf16.mxu0 0
  %854 = vmatpush1.bf16.msra.mxu0 %v820
  %855 = vmatprep.subr.bf16.mxu0 0
  %856 = vmatpush1.bf16.msra.mxu0 %v818
  %857 = vmatprep.subr.bf16.mxu0 0
  %858 = vmatpush1.bf16.msra.mxu0 %v816
  %859 = vmatprep.subr.bf16.mxu0 0
  %860 = vmatpush2.bf16.msra.mxu0 0
  %861 = vmatprep.subr.bf16.mxu0 0
  %862 = vmatpush2.bf16.msra.mxu0 0
  %863 = vmatprep.subr.bf16.mxu0 0
  %864 = vmatpush2.bf16.msra.mxu0 0
  %865 = vmatprep.subr.bf16.mxu0 0
  %866 = vmatpush2.bf16.msra.mxu0 0
  %867 = vmatprep.subr.bf16.mxu0 0
  %868 = vmatpush2.bf16.msra.mxu0 0
  %869 = vmatprep.subr.bf16.mxu0 0
  %870 = vmatpush2.bf16.msra.mxu0 0
  %871 = vmatprep.subr.bf16.mxu0 0
  %872 = vmatpush2.bf16.msra.mxu0 0
  %873 = vmatprep.subr.bf16.mxu0 0
  %874 = vmatpush2.bf16.msra.mxu0 0
  %875 = vmatprep.mubr.bf16.mxu0 0
  %876 = vmatmul.mubr.bf16.gmra.mxu0 %v837
  %v877 = vpop.f32.mrf.mxu0
  %v878 = vadd.f32 0.0, %v877
  %v879 = vpop.f32.mrf.mxu0
  %v880 = vpop.f32.mrf.mxu0
  %v881 = vpop.f32.mrf.mxu0
  %882 = vdwg.mxu0
  %v883 = vpack.c.bf16 %v878, %v878
  %885 = vrot.lane.b32.xlu0 %v708, 112
  %v886 = vpop.permute.xlu0 %885
  %887 = vrot.lane.b32.xlu0 %v709, 80
  %v888 = vpop.permute.xlu0 %887
  %889 = vrot.lane.b32.xlu0 %v710, 80
  %v890 = vpop.permute.xlu0 %889
  %891 = vrot.lane.b32.xlu0 %v711, 80
  %v892 = vpop.permute.xlu0 %891
  %893 = vrot.lane.b32.xlu0 %v712, 80
  %v894 = vpop.permute.xlu0 %893
  %895 = vrot.lane.b32.xlu0 %v713, 80
  %v896 = vpop.permute.xlu0 %895
  %897 = vrot.lane.b32.xlu0 %v714, 80
  %v898 = vpop.permute.xlu0 %897
  %899 = vrot.lane.b32.xlu0 %v715, 80
  %v900 = vpop.permute.xlu0 %899
  %v902 = vsel %vm737, %v886, 0
  %v905 = vsel %vm737, %v888, 0
  %v908 = vsel %vm737, %v890, 0
  %v911 = vsel %vm737, %v892, 0
  %v914 = vsel %vm737, %v894, 0
  %v917 = vsel %vm737, %v896, 0
  %v920 = vsel %vm737, %v898, 0
  %v923 = vsel %vm737, %v900, 0
  %925 = vmatprep.subr.bf16.mxu0 0
  %926 = vmatpush1.bf16.xpose.msra.mxu0 0
  %927 = vmatprep.subr.bf16.mxu0 0
  %928 = vmatpush1.bf16.xpose.msra.mxu0 %v923
  %929 = vmatprep.subr.bf16.mxu0 0
  %930 = vmatpush1.bf16.xpose.msra.mxu0 %v920
  %931 = vmatprep.subr.bf16.mxu0 0
  %932 = vmatpush1.bf16.xpose.msra.mxu0 %v917
  %933 = vmatprep.subr.bf16.mxu0 0
  %934 = vmatpush1.bf16.xpose.msra.mxu0 %v914
  %935 = vmatprep.subr.bf16.mxu0 0
  %936 = vmatpush1.bf16.xpose.msra.mxu0 %v911
  %937 = vmatprep.subr.bf16.mxu0 0
  %938 = vmatpush1.bf16.xpose.msra.mxu0 %v908
  %939 = vmatprep.subr.bf16.mxu0 0
  %940 = vmatpush1.bf16.xpose.msra.mxu0 %v905
  %941 = vmatprep.subr.bf16.mxu0 0
  %942 = vmatpush2.bf16.xpose.msra.mxu0 0
  %943 = vmatprep.subr.bf16.mxu0 0
  %944 = vmatpush2.bf16.xpose.msra.mxu0 0
  %945 = vmatprep.subr.bf16.mxu0 0
  %946 = vmatpush2.bf16.xpose.msra.mxu0 0
  %947 = vmatprep.subr.bf16.mxu0 0
  %948 = vmatpush2.bf16.xpose.msra.mxu0 0
  %949 = vmatprep.subr.bf16.mxu0 0
  %950 = vmatpush2.bf16.xpose.msra.mxu0 0
  %951 = vmatprep.subr.bf16.mxu0 0
  %952 = vmatpush2.bf16.xpose.msra.mxu0 0
  %953 = vmatprep.subr.bf16.mxu0 0
  %954 = vmatpush2.bf16.xpose.msra.mxu0 0
  %955 = vmatprep.subr.bf16.mxu0 0
  %956 = vmatpush2.bf16.xpose.msra.mxu0 0
  %957 = vmatprep.mubr.bf16.mxu0 0
  %958 = vmatmul.mubr.bf16.gmra.mxu0 %v902
  %v959 = vpop.f32.mrf.mxu0
  %v960 = vadd.f32 %v703, %v959
  %v961 = vpop.f32.mrf.mxu0
  %v962 = vpop.f32.mrf.mxu0
  %v963 = vpop.f32.mrf.mxu0
  %964 = vdwg.mxu0
  %v965 = vsel %vm802, %v960, -inf
  %966 = vmax.xlane.f32.xlu0 %v965
  %v967 = vpop.xlane.xlu0 %966
  %v968 = vsub.f32 %v960, %v967
  %v969 = vmul.f32 %v968, 1.442695
  %v970 = vpow.pop %v969
  %v971 = vsel %vm802, %v970, 0.0
  %972 = vadd.xlane.f32.xlu0 %v971
  %v973 = vpop.xlane.xlu0 %972
  %v974 = vrcp.pop %v973
  %v975 = vmul.f32 %v970, %v974
  %v976 = vpack.c.bf16 %v975, %v975
  %977 = vrot.lane.b32.xlu0 %v709, 48
  %v978 = vpop.permute.xlu0 %977
  %979 = vrot.lane.b32.xlu0 %v710, 48
  %v980 = vpop.permute.xlu0 %979
  %981 = vrot.lane.b32.xlu0 %v711, 48
  %v982 = vpop.permute.xlu0 %981
  %983 = vrot.lane.b32.xlu0 %v712, 48
  %v984 = vpop.permute.xlu0 %983
  %985 = vrot.lane.b32.xlu0 %v713, 48
  %v986 = vpop.permute.xlu0 %985
  %987 = vrot.lane.b32.xlu0 %v714, 48
  %v988 = vpop.permute.xlu0 %987
  %989 = vrot.lane.b32.xlu0 %v715, 48
  %v990 = vpop.permute.xlu0 %989
  %v998 = vsel %vm835, %v976, 0
  %v1001 = vsel %vm839, %v990, 0
  %1003 = vmatprep.subr.bf16.mxu0 0
  %1004 = vmatpush1.bf16.msra.mxu0 0
  %1005 = vmatprep.subr.bf16.mxu0 0
  %1006 = vmatpush1.bf16.msra.mxu0 %v1001
  %1007 = vmatprep.subr.bf16.mxu0 0
  %1008 = vmatpush1.bf16.msra.mxu0 %v988
  %1009 = vmatprep.subr.bf16.mxu0 0
  %1010 = vmatpush1.bf16.msra.mxu0 %v986
  %1011 = vmatprep.subr.bf16.mxu0 0
  %1012 = vmatpush1.bf16.msra.mxu0 %v984
  %1013 = vmatprep.subr.bf16.mxu0 0
  %1014 = vmatpush1.bf16.msra.mxu0 %v982
  %1015 = vmatprep.subr.bf16.mxu0 0
  %1016 = vmatpush1.bf16.msra.mxu0 %v980
  %1017 = vmatprep.subr.bf16.mxu0 0
  %1018 = vmatpush1.bf16.msra.mxu0 %v978
  %1019 = vmatprep.subr.bf16.mxu0 0
  %1020 = vmatpush2.bf16.msra.mxu0 0
  %1021 = vmatprep.subr.bf16.mxu0 0
  %1022 = vmatpush2.bf16.msra.mxu0 0
  %1023 = vmatprep.subr.bf16.mxu0 0
  %1024 = vmatpush2.bf16.msra.mxu0 0
  %1025 = vmatprep.subr.bf16.mxu0 0
  %1026 = vmatpush2.bf16.msra.mxu0 0
  %1027 = vmatprep.subr.bf16.mxu0 0
  %1028 = vmatpush2.bf16.msra.mxu0 0
  %1029 = vmatprep.subr.bf16.mxu0 0
  %1030 = vmatpush2.bf16.msra.mxu0 0
  %1031 = vmatprep.subr.bf16.mxu0 0
  %1032 = vmatpush2.bf16.msra.mxu0 0
  %1033 = vmatprep.subr.bf16.mxu0 0
  %1034 = vmatpush2.bf16.msra.mxu0 0
  %1035 = vmatprep.mubr.bf16.mxu0 0
  %1036 = vmatmul.mubr.bf16.gmra.mxu0 %v998
  %v1037 = vpop.f32.mrf.mxu0
  %v1038 = vadd.f32 0.0, %v1037
  %v1039 = vpop.f32.mrf.mxu0
  %v1040 = vpop.f32.mrf.mxu0
  %v1041 = vpop.f32.mrf.mxu0
  %1042 = vdwg.mxu0
  %v1043 = vpack.c.bf16 %v1038, %v1038
  %v1046 = vunpack.c.l.b16 %v706
  %v1047 = vunpack.c.l.b16 %v707
  %v1048 = vpack.c.b16 %v1047, %v1046
  %v1051 = vsel %vm737, %v1043, 0
  %1053 = vmatprep.subr.bf16.mxu0 0
  %1054 = vmatpush1.bf16.msra.mxu0 0
  %1055 = vmatprep.subr.bf16.mxu0 0
  %1056 = vmatpush1.bf16.msra.mxu0 0
  %1057 = vmatprep.subr.bf16.mxu0 0
  %1058 = vmatpush1.bf16.msra.mxu0 0
  %1059 = vmatprep.subr.bf16.mxu0 0
  %1060 = vmatpush1.bf16.msra.mxu0 0
  %1061 = vmatprep.subr.bf16.mxu0 0
  %1062 = vmatpush1.bf16.msra.mxu0 0
  %1063 = vmatprep.subr.bf16.mxu0 0
  %1064 = vmatpush1.bf16.msra.mxu0 0
  %1065 = vmatprep.subr.bf16.mxu0 0
  %1066 = vmatpush1.bf16.msra.mxu0 0
  %1067 = vmatprep.subr.bf16.mxu0 0
  %1068 = vmatpush1.bf16.msra.mxu0 %v1048
  %1069 = vmatprep.subr.bf16.mxu0 0
  %1070 = vmatpush2.bf16.msra.mxu0 0
  %1071 = vmatprep.subr.bf16.mxu0 0
  %1072 = vmatpush2.bf16.msra.mxu0 0
  %1073 = vmatprep.subr.bf16.mxu0 0
  %1074 = vmatpush2.bf16.msra.mxu0 0
  %1075 = vmatprep.subr.bf16.mxu0 0
  %1076 = vmatpush2.bf16.msra.mxu0 0
  %1077 = vmatprep.subr.bf16.mxu0 0
  %1078 = vmatpush2.bf16.msra.mxu0 0
  %1079 = vmatprep.subr.bf16.mxu0 0
  %1080 = vmatpush2.bf16.msra.mxu0 0
  %1081 = vmatprep.subr.bf16.mxu0 0
  %1082 = vmatpush2.bf16.msra.mxu0 0
  %1083 = vmatprep.subr.bf16.mxu0 0
  %1084 = vmatpush2.bf16.msra.mxu0 0
  %1085 = vmatprep.mubr.bf16.mxu0 0
  %1086 = vmatmul.mubr.bf16.gmra.mxu0 %v1051
  %v1087 = vpop.f32.mrf.mxu0
  %v1088 = vadd.f32 0.0, %v1087
  %v1089 = vpop.f32.mrf.mxu0
  %v1090 = vpop.f32.mrf.mxu0
  %v1091 = vpop.f32.mrf.mxu0
  %1092 = vdwg.mxu0
  %v1095 = vunpack.c.l.b16 %v704
  %v1096 = vunpack.c.l.b16 %v705
  %v1097 = vpack.c.b16 %v1096, %v1095
  %v1100 = vsel %vm737, %v883, 0
  %1102 = vmatprep.subr.bf16.mxu0 0
  %1103 = vmatpush1.bf16.msra.mxu0 0
  %1104 = vmatprep.subr.bf16.mxu0 0
  %1105 = vmatpush1.bf16.msra.mxu0 0
  %1106 = vmatprep.subr.bf16.mxu0 0
  %1107 = vmatpush1.bf16.msra.mxu0 0
  %1108 = vmatprep.subr.bf16.mxu0 0
  %1109 = vmatpush1.bf16.msra.mxu0 0
  %1110 = vmatprep.subr.bf16.mxu0 0
  %1111 = vmatpush1.bf16.msra.mxu0 0
  %1112 = vmatprep.subr.bf16.mxu0 0
  %1113 = vmatpush1.bf16.msra.mxu0 0
  %1114 = vmatprep.subr.bf16.mxu0 0
  %1115 = vmatpush1.bf16.msra.mxu0 0
  %1116 = vmatprep.subr.bf16.mxu0 0
  %1117 = vmatpush1.bf16.msra.mxu0 %v1097
  %1118 = vmatprep.subr.bf16.mxu0 0
  %1119 = vmatpush2.bf16.msra.mxu0 0
  %1120 = vmatprep.subr.bf16.mxu0 0
  %1121 = vmatpush2.bf16.msra.mxu0 0
  %1122 = vmatprep.subr.bf16.mxu0 0
  %1123 = vmatpush2.bf16.msra.mxu0 0
  %1124 = vmatprep.subr.bf16.mxu0 0
  %1125 = vmatpush2.bf16.msra.mxu0 0
  %1126 = vmatprep.subr.bf16.mxu0 0
  %1127 = vmatpush2.bf16.msra.mxu0 0
  %1128 = vmatprep.subr.bf16.mxu0 0
  %1129 = vmatpush2.bf16.msra.mxu0 0
  %1130 = vmatprep.subr.bf16.mxu0 0
  %1131 = vmatpush2.bf16.msra.mxu0 0
  %1132 = vmatprep.subr.bf16.mxu0 0
  %1133 = vmatpush2.bf16.msra.mxu0 0
  %1134 = vmatprep.mubr.bf16.mxu0 0
  %1135 = vmatmul.mubr.bf16.gmra.mxu0 %v1100
  %v1136 = vpop.f32.mrf.mxu0
  %v1137 = vadd.f32 %v1088, %v1136
  %v1138 = vpop.f32.mrf.mxu0
  %v1139 = vpop.f32.mrf.mxu0
  %v1140 = vpop.f32.mrf.mxu0
  %1141 = vdwg.mxu0
  %v1142 = vadd.f32 %v351, %v1137
  %v1143 = vld [vmem:[%s10] sm:$0x1]
  %v1145 = vlaneseq
  %v1146 = vshrl.u32 %v1145, 7
  %v1147 = vsub.s32 0, %v1146
  %v1148 = vrot.slane %v1143, %v1147
  %v1150 = vadd.f32 %v1142, %v1148
  %v1151 = vld [vmem:[%s11] sm:$0x1]
  %v1152 = vld [vmem:[%s12] sm:$0x1]
  %v1153 = vsel %vm391, %v1150, 0.0
  %1154 = vadd.xlane.f32.xlu0 %v1153
  %v1155 = vpop.xlane.xlu0 %1154
  %v1156 = vmul.f32 %v1155, %v395
  %v1157 = vsub.f32 %v1150, %v1156
  %v1158 = vmul.f32 %v1157, %v1157
  %v1159 = vsel %vm391, %v1158, 0.0
  %1160 = vadd.xlane.f32.xlu0 %v1159
  %v1161 = vpop.xlane.xlu0 %1160
  %v1162 = vmul.f32 %v1161, %v395
  %v1163 = vadd.f32 %v1162, 1e-06
  %v1164 = vrsqrt.pop %v1163
  %v1165 = vmul.f32 %v1157, %v1164
  %v1167 = vlaneseq
  %v1168 = vshrl.u32 %v1167, 7
  %v1169 = vsub.s32 0, %v1168
  %v1170 = vrot.slane %v1151, %v1169
  %v1172 = vmul.f32 %v1165, %v1170
  %v1174 = vlaneseq
  %v1175 = vshrl.u32 %v1174, 7
  %v1176 = vsub.s32 0, %v1175
  %v1177 = vrot.slane %v1152, %v1176
  %v1179 = vadd.f32 %v1172, %v1177
  %v1180 = vld [vmem:[%s13] sm:$0xf]
  %v1181 = vld [vmem:[%s13 + $0x4] sm:$0xf]
  %v1182 = vld [vmem:[%s13 + $0x8] sm:$0xf]
  %v1183 = vld [vmem:[%s13 + $0xc] sm:$0xf]
  %v1184 = vpack.c.bf16 %v1179, %v1179
  %v1185 = vld [vmem:[%s14] sm:$0x1]
  %v1187 = vlaneseq
  %v1188 = vshrl.u32 %v1187, 7
  %v1189 = vsub.s32 0, %v1188
  %v1190 = vrot.slane %v1185, %v1189
  %v1196 = vunpack.c.l.b16 %v1180
  %v1197 = vunpack.c.l.b16 %v1181
  %v1198 = vunpack.c.l.b16 %v1182
  %v1199 = vunpack.c.l.b16 %v1183
  %v1200 = vpack.c.b16 %v1197, %v1196
  %v1201 = vpack.c.b16 %v1199, %v1198
  %v1205 = vsel %vm354, %v1184, 0
  %1207 = vmatprep.subr.bf16.mxu0 0
  %1208 = vmatpush1.bf16.msra.mxu0 0
  %1209 = vmatprep.subr.bf16.mxu0 0
  %1210 = vmatpush1.bf16.msra.mxu0 0
  %1211 = vmatprep.subr.bf16.mxu0 0
  %1212 = vmatpush1.bf16.msra.mxu0 0
  %1213 = vmatprep.subr.bf16.mxu0 0
  %1214 = vmatpush1.bf16.msra.mxu0 0
  %1215 = vmatprep.subr.bf16.mxu0 0
  %1216 = vmatpush1.bf16.msra.mxu0 0
  %1217 = vmatprep.subr.bf16.mxu0 0
  %1218 = vmatpush1.bf16.msra.mxu0 0
  %1219 = vmatprep.subr.bf16.mxu0 0
  %1220 = vmatpush1.bf16.msra.mxu0 %v1201
  %1221 = vmatprep.subr.bf16.mxu0 0
  %1222 = vmatpush1.bf16.msra.mxu0 %v1200
  %1223 = vmatprep.subr.bf16.mxu0 0
  %1224 = vmatpush2.bf16.msra.mxu0 0
  %1225 = vmatprep.subr.bf16.mxu0 0
  %1226 = vmatpush2.bf16.msra.mxu0 0
  %1227 = vmatprep.subr.bf16.mxu0 0
  %1228 = vmatpush2.bf16.msra.mxu0 0
  %1229 = vmatprep.subr.bf16.mxu0 0
  %1230 = vmatpush2.bf16.msra.mxu0 0
  %1231 = vmatprep.subr.bf16.mxu0 0
  %1232 = vmatpush2.bf16.msra.mxu0 0
  %1233 = vmatprep.subr.bf16.mxu0 0
  %1234 = vmatpush2.bf16.msra.mxu0 0
  %1235 = vmatprep.subr.bf16.mxu0 0
  %1236 = vmatpush2.bf16.msra.mxu0 0
  %1237 = vmatprep.subr.bf16.mxu0 0
  %1238 = vmatpush2.bf16.msra.mxu0 0
  %1239 = vmatprep.mubr.bf16.mxu0 0
  %1240 = vmatmul.mubr.bf16.gmra.mxu0 %v1205
  %v1241 = vpop.f32.mrf.mxu0
  %v1242 = vadd.f32 %v1190, %v1241
  %v1243 = vpop.f32.mrf.mxu0
  %v1244 = vpop.f32.mrf.mxu0
  %v1245 = vpop.f32.mrf.mxu0
  %1246 = vdwg.mxu0
  %v1247 = vmul.f32 %v1242, %v1242
  %v1248 = vmul.f32 %v1242, %v1247
  %v1249 = vmul.f32 %v1248, 0.044715
  %v1250 = vadd.f32 %v1242, %v1249
  %v1251 = vmul.f32 %v1250, 0.7978846
  %v1252 = vtanh.pop %v1251
  %v1253 = vadd.f32 %v1252, 1.0
  %v1254 = vmul.f32 %v1253, 0.5
  %v1255 = vmul.f32 %v1242, %v1254
  %v1256 = vld [vmem:[%s15] sm:$0xf]
  %v1257 = vld [vmem:[%s15 + $0x4] sm:$0xf]
  %v1258 = vld [vmem:[%s15 + $0x8] sm:$0xf]
  %v1259 = vld [vmem:[%s15 + $0xc] sm:$0xf]
  %v1260 = vld [vmem:[%s15 + $0x10] sm:$0xf]
  %v1261 = vld [vmem:[%s15 + $0x14] sm:$0xf]
  %v1262 = vld [vmem:[%s15 + $0x18] sm:$0xf]
  %v1263 = vld [vmem:[%s15 + $0x1c] sm:$0xf]
  %v1264 = vpack.c.bf16 %v1255, %v1255
  %v1265 = vld [vmem:[%s16] sm:$0x1]
  %v1267 = vlaneseq
  %v1268 = vshrl.u32 %v1267, 7
  %v1269 = vsub.s32 0, %v1268
  %v1270 = vrot.slane %v1265, %v1269
  %v1280 = vunpack.c.l.b16 %v1256
  %v1281 = vunpack.c.l.b16 %v1257
  %v1282 = vunpack.c.l.b16 %v1258
  %v1283 = vunpack.c.l.b16 %v1259
  %v1284 = vunpack.c.l.b16 %v1260
  %v1285 = vunpack.c.l.b16 %v1261
  %v1286 = vunpack.c.l.b16 %v1262
  %v1287 = vunpack.c.l.b16 %v1263
  %v1288 = vpack.c.b16 %v1281, %v1280
  %v1289 = vpack.c.b16 %v1283, %v1282
  %v1290 = vpack.c.b16 %v1285, %v1284
  %v1291 = vpack.c.b16 %v1287, %v1286
  %vm1296 = vcmask 523264
  %v1298 = vsel %vm1296, %v1264, 0
  %1300 = vmatprep.subr.bf16.mxu0 0
  %1301 = vmatpush1.bf16.msra.mxu0 0
  %1302 = vmatprep.subr.bf16.mxu0 0
  %1303 = vmatpush1.bf16.msra.mxu0 0
  %1304 = vmatprep.subr.bf16.mxu0 0
  %1305 = vmatpush1.bf16.msra.mxu0 0
  %1306 = vmatprep.subr.bf16.mxu0 0
  %1307 = vmatpush1.bf16.msra.mxu0 0
  %1308 = vmatprep.subr.bf16.mxu0 0
  %1309 = vmatpush1.bf16.msra.mxu0 %v1291
  %1310 = vmatprep.subr.bf16.mxu0 0
  %1311 = vmatpush1.bf16.msra.mxu0 %v1290
  %1312 = vmatprep.subr.bf16.mxu0 0
  %1313 = vmatpush1.bf16.msra.mxu0 %v1289
  %1314 = vmatprep.subr.bf16.mxu0 0
  %1315 = vmatpush1.bf16.msra.mxu0 %v1288
  %1316 = vmatprep.subr.bf16.mxu0 0
  %1317 = vmatpush2.bf16.msra.mxu0 0
  %1318 = vmatprep.subr.bf16.mxu0 0
  %1319 = vmatpush2.bf16.msra.mxu0 0
  %1320 = vmatprep.subr.bf16.mxu0 0
  %1321 = vmatpush2.bf16.msra.mxu0 0
  %1322 = vmatprep.subr.bf16.mxu0 0
  %1323 = vmatpush2.bf16.msra.mxu0 0
  %1324 = vmatprep.subr.bf16.mxu0 0
  %1325 = vmatpush2.bf16.msra.mxu0 0
  %1326 = vmatprep.subr.bf16.mxu0 0
  %1327 = vmatpush2.bf16.msra.mxu0 0
  %1328 = vmatprep.subr.bf16.mxu0 0
  %1329 = vmatpush2.bf16.msra.mxu0 0
  %1330 = vmatprep.subr.bf16.mxu0 0
  %1331 = vmatpush2.bf16.msra.mxu0 0
  %1332 = vmatprep.mubr.bf16.mxu0 0
  %1333 = vmatmul.mubr.bf16.gmra.mxu0 %v1298
  %v1334 = vpop.f32.mrf.mxu0
  %v1335 = vadd.f32 %v1270, %v1334
  %v1336 = vpop.f32.mrf.mxu0
  %v1337 = vpop.f32.mrf.mxu0
  %v1338 = vpop.f32.mrf.mxu0
  %1339 = vdwg.mxu0
  %v1340 = vadd.f32 %v1150, %v1335
  %v1341 = vld [vmem:[%s17] sm:$0x1]
  %v1342 = vld [vmem:[%s18] sm:$0x1]
  %v1343 = vsel %vm391, %v1340, 0.0
  %1344 = vadd.xlane.f32.xlu0 %v1343
  %v1345 = vpop.xlane.xlu0 %1344
  %v1346 = vmul.f32 %v1345, %v395
  %v1347 = vsub.f32 %v1340, %v1346
  %v1348 = vmul.f32 %v1347, %v1347
  %v1349 = vsel %vm391, %v1348, 0.0
  %1350 = vadd.xlane.f32.xlu0 %v1349
  %v1351 = vpop.xlane.xlu0 %1350
  %v1352 = vmul.f32 %v1351, %v395
  %v1353 = vadd.f32 %v1352, 1e-06
  %v1354 = vrsqrt.pop %v1353
  %v1355 = vmul.f32 %v1347, %v1354
  %v1357 = vlaneseq
  %v1358 = vshrl.u32 %v1357, 7
  %v1359 = vsub.s32 0, %v1358
  %v1360 = vrot.slane %v1341, %v1359
  %v1362 = vmul.f32 %v1355, %v1360
  %v1364 = vlaneseq
  %v1365 = vshrl.u32 %v1364, 7
  %v1366 = vsub.s32 0, %v1365
  %v1367 = vrot.slane %v1342, %v1366
  %v1369 = vadd.f32 %v1362, %v1367
  %v1370 = vld [vmem:[%s19] sm:$0xf]
  %v1371 = vld [vmem:[%s19 + $0x4] sm:$0xf]
  %v1372 = vld [vmem:[%s19 + $0x8] sm:$0xf]
  %v1373 = vld [vmem:[%s19 + $0xc] sm:$0xf]
  %v1374 = vld [vmem:[%s19 + $0x10] sm:$0xf]
  %v1375 = vld [vmem:[%s19 + $0x14] sm:$0xf]
  %v1376 = vld [vmem:[%s19 + $0x18] sm:$0xf]
  %v1377 = vld [vmem:[%s19 + $0x1c] sm:$0xf]
  %v1378 = vld [vmem:[%s19 + $0x20] sm:$0xf]
  %v1379 = vld [vmem:[%s19 + $0x24] sm:$0xf]
  %v1380 = vld [vmem:[%s19 + $0x28] sm:$0xf]
  %v1381 = vld [vmem:[%s19 + $0x2c] sm:$0xf]
  %v1382 = vpack.c.bf16 %v1369, %v1369
  %v1384 = vrot.slane %v1382, 1
  %v1389 = vunpack.c.l.b16 %v1374
  %v1390 = vunpack.c.l.b16 %v1375
  %v1391 = vunpack.c.l.b16 %v1376
  %v1392 = vunpack.c.l.b16 %v1377
  %v1393 = vpack.c.b16 %v1390, %v1389
  %v1394 = vpack.c.b16 %v1392, %v1391
  %v1398 = vsel %vm354, %v1384, 0
  %1400 = vmatprep.subr.bf16.mxu0 0
  %1401 = vmatpush1.bf16.msra.mxu0 0
  %1402 = vmatprep.subr.bf16.mxu0 0
  %1403 = vmatpush1.bf16.msra.mxu0 0
  %1404 = vmatprep.subr.bf16.mxu0 0
  %1405 = vmatpush1.bf16.msra.mxu0 0
  %1406 = vmatprep.subr.bf16.mxu0 0
  %1407 = vmatpush1.bf16.msra.mxu0 0
  %1408 = vmatprep.subr.bf16.mxu0 0
  %1409 = vmatpush1.bf16.msra.mxu0 0
  %1410 = vmatprep.subr.bf16.mxu0 0
  %1411 = vmatpush1.bf16.msra.mxu0 0
  %1412 = vmatprep.subr.bf16.mxu0 0
  %1413 = vmatpush1.bf16.msra.mxu0 %v1394
  %1414 = vmatprep.subr.bf16.mxu0 0
  %1415 = vmatpush1.bf16.msra.mxu0 %v1393
  %1416 = vmatprep.subr.bf16.mxu0 0
  %1417 = vmatpush2.bf16.msra.mxu0 0
  %1418 = vmatprep.subr.bf16.mxu0 0
  %1419 = vmatpush2.bf16.msra.mxu0 0
  %1420 = vmatprep.subr.bf16.mxu0 0
  %1421 = vmatpush2.bf16.msra.mxu0 0
  %1422 = vmatprep.subr.bf16.mxu0 0
  %1423 = vmatpush2.bf16.msra.mxu0 0
  %1424 = vmatprep.subr.bf16.mxu0 0
  %1425 = vmatpush2.bf16.msra.mxu0 0
  %1426 = vmatprep.subr.bf16.mxu0 0
  %1427 = vmatpush2.bf16.msra.mxu0 0
  %1428 = vmatprep.subr.bf16.mxu0 0
  %1429 = vmatpush2.bf16.msra.mxu0 0
  %1430 = vmatprep.subr.bf16.mxu0 0
  %1431 = vmatpush2.bf16.msra.mxu0 0
  %1432 = vmatprep.mubr.bf16.mxu0 0
  %1433 = vmatmul.mubr.bf16.gmra.mxu0 %v1398
  %v1434 = vpop.f32.mrf.mxu0
  %v1435 = vadd.f32 0.0, %v1434
  %v1436 = vpop.f32.mrf.mxu0
  %v1437 = vpop.f32.mrf.mxu0
  %v1438 = vpop.f32.mrf.mxu0
  %1439 = vdwg.mxu0
  %v1444 = vunpack.c.l.b16 %v1370
  %v1445 = vunpack.c.l.b16 %v1371
  %v1446 = vunpack.c.l.b16 %v1372
  %v1447 = vunpack.c.l.b16 %v1373
  %v1448 = vpack.c.b16 %v1445, %v1444
  %v1449 = vpack.c.b16 %v1447, %v1446
  %v1453 = vsel %vm354, %v1382, 0
  %1455 = vmatprep.subr.bf16.mxu0 0
  %1456 = vmatpush1.bf16.msra.mxu0 0
  %1457 = vmatprep.subr.bf16.mxu0 0
  %1458 = vmatpush1.bf16.msra.mxu0 0
  %1459 = vmatprep.subr.bf16.mxu0 0
  %1460 = vmatpush1.bf16.msra.mxu0 0
  %1461 = vmatprep.subr.bf16.mxu0 0
  %1462 = vmatpush1.bf16.msra.mxu0 0
  %1463 = vmatprep.subr.bf16.mxu0 0
  %1464 = vmatpush1.bf16.msra.mxu0 0
  %1465 = vmatprep.subr.bf16.mxu0 0
  %1466 = vmatpush1.bf16.msra.mxu0 0
  %1467 = vmatprep.subr.bf16.mxu0 0
  %1468 = vmatpush1.bf16.msra.mxu0 %v1449
  %1469 = vmatprep.subr.bf16.mxu0 0
  %1470 = vmatpush1.bf16.msra.mxu0 %v1448
  %1471 = vmatprep.subr.bf16.mxu0 0
  %1472 = vmatpush2.bf16.msra.mxu0 0
  %1473 = vmatprep.subr.bf16.mxu0 0
  %1474 = vmatpush2.bf16.msra.mxu0 0
  %1475 = vmatprep.subr.bf16.mxu0 0
  %1476 = vmatpush2.bf16.msra.mxu0 0
  %1477 = vmatprep.subr.bf16.mxu0 0
  %1478 = vmatpush2.bf16.msra.mxu0 0
  %1479 = vmatprep.subr.bf16.mxu0 0
  %1480 = vmatpush2.bf16.msra.mxu0 0
  %1481 = vmatprep.subr.bf16.mxu0 0
  %1482 = vmatpush2.bf16.msra.mxu0 0
  %1483 = vmatprep.subr.bf16.mxu0 0
  %1484 = vmatpush2.bf16.msra.mxu0 0
  %1485 = vmatprep.subr.bf16.mxu0 0
  %1486 = vmatpush2.bf16.msra.mxu0 0
  %1487 = vmatprep.mubr.bf16.mxu0 0
  %1488 = vmatmul.mubr.bf16.gmra.mxu0 %v1453
  %v1489 = vpop.f32.mrf.mxu0
  %v1490 = vadd.f32 %v1435, %v1489
  %v1491 = vpop.f32.mrf.mxu0
  %v1492 = vpop.f32.mrf.mxu0
  %v1493 = vpop.f32.mrf.mxu0
  %1494 = vdwg.mxu0
  %v1495 = vrot.slane %v1382, 2
  %v1500 = vunpack.c.l.b16 %v1378
  %v1501 = vunpack.c.l.b16 %v1379
  %v1502 = vunpack.c.l.b16 %v1380
  %v1503 = vunpack.c.l.b16 %v1381
  %v1504 = vpack.c.b16 %v1501, %v1500
  %v1505 = vpack.c.b16 %v1503, %v1502
  %v1509 = vsel %vm354, %v1495, 0
  %1511 = vmatprep.subr.bf16.mxu0 0
  %1512 = vmatpush1.bf16.msra.mxu0 0
  %1513 = vmatprep.subr.bf16.mxu0 0
  %1514 = vmatpush1.bf16.msra.mxu0 0
  %1515 = vmatprep.subr.bf16.mxu0 0
  %1516 = vmatpush1.bf16.msra.mxu0 0
  %1517 = vmatprep.subr.bf16.mxu0 0
  %1518 = vmatpush1.bf16.msra.mxu0 0
  %1519 = vmatprep.subr.bf16.mxu0 0
  %1520 = vmatpush1.bf16.msra.mxu0 0
  %1521 = vmatprep.subr.bf16.mxu0 0
  %1522 = vmatpush1.bf16.msra.mxu0 0
  %1523 = vmatprep.subr.bf16.mxu0 0
  %1524 = vmatpush1.bf16.msra.mxu0 %v1505
  %1525 = vmatprep.subr.bf16.mxu0 0
  %1526 = vmatpush1.bf16.msra.mxu0 %v1504
  %1527 = vmatprep.subr.bf16.mxu0 0
  %1528 = vmatpush2.bf16.msra.mxu0 0
  %1529 = vmatprep.subr.bf16.mxu0 0
  %1530 = vmatpush2.bf16.msra.mxu0 0
  %1531 = vmatprep.subr.bf16.mxu0 0
  %1532 = vmatpush2.bf16.msra.mxu0 0
  %1533 = vmatprep.subr.bf16.mxu0 0
  %1534 = vmatpush2.bf16.msra.mxu0 0
  %1535 = vmatprep.subr.bf16.mxu0 0
  %1536 = vmatpush2.bf16.msra.mxu0 0
  %1537 = vmatprep.subr.bf16.mxu0 0
  %1538 = vmatpush2.bf16.msra.mxu0 0
  %1539 = vmatprep.subr.bf16.mxu0 0
  %1540 = vmatpush2.bf16.msra.mxu0 0
  %1541 = vmatprep.subr.bf16.mxu0 0
  %1542 = vmatpush2.bf16.msra.mxu0 0
  %1543 = vmatprep.mubr.bf16.mxu0 0
  %1544 = vmatmul.mubr.bf16.gmra.mxu0 %v1509
  %v1545 = vpop.f32.mrf.mxu0
  %v1546 = vadd.f32 0.0, %v1545
  %v1547 = vpop.f32.mrf.mxu0
  %v1548 = vpop.f32.mrf.mxu0
  %v1549 = vpop.f32.mrf.mxu0
  %1550 = vdwg.mxu0
  %v1551 = vadd.f32 %v1490, %v1546
  %v1552 = vld [vmem:[%s20] sm:$0x1]
  %v1554 = vlaneseq
  %v1555 = vshrl.u32 %v1554, 7
  %v1556 = vsub.s32 0, %v1555
  %v1557 = vrot.slane %v1552, %v1556
  %v1559 = vadd.f32 %v1551, %v1557
  %v1560 = vmul.f32 %v1559, %v1559
  %v1561 = vmul.f32 %v1559, %v1560
  %v1562 = vmul.f32 %v1561, 0.044715
  %v1563 = vadd.f32 %v1559, %v1562
  %v1564 = vmul.f32 %v1563, 0.7978846
  %v1565 = vtanh.pop %v1564
  %v1566 = vadd.f32 %v1565, 1.0
  %v1567 = vmul.f32 %v1566, 0.5
  %v1568 = vmul.f32 %v1559, %v1567
  %v1569 = vld [vmem:[%s21] sm:$0xf]
  %v1570 = vld [vmem:[%s21 + $0x4] sm:$0xf]
  %v1571 = vld [vmem:[%s21 + $0x8] sm:$0xf]
  %v1572 = vld [vmem:[%s21 + $0xc] sm:$0xf]
  %v1573 = vpack.c.bf16 %v1568, %v1568
  %v1574 = vld [vmem:[#allocation2] sm:$0x1]
  %v1576 = vlaneseq
  %v1577 = vshrl.u32 %v1576, 7
  %v1578 = vsub.s32 0, %v1577
  %v1579 = vrot.slane %v1574, %v1578
  %v1585 = vunpack.c.l.b16 %v1569
  %v1586 = vunpack.c.l.b16 %v1570
  %v1587 = vunpack.c.l.b16 %v1571
  %v1588 = vunpack.c.l.b16 %v1572
  %v1589 = vpack.c.b16 %v1586, %v1585
  %v1590 = vpack.c.b16 %v1588, %v1587
  %v1594 = vsel %vm354, %v1573, 0
  %1596 = vmatprep.subr.bf16.mxu0 0
  %1597 = vmatpush1.bf16.msra.mxu0 0
  %1598 = vmatprep.subr.bf16.mxu0 0
  %1599 = vmatpush1.bf16.msra.mxu0 0
  %1600 = vmatprep.subr.bf16.mxu0 0
  %1601 = vmatpush1.bf16.msra.mxu0 0
  %1602 = vmatprep.subr.bf16.mxu0 0
  %1603 = vmatpush1.bf16.msra.mxu0 0
  %1604 = vmatprep.subr.bf16.mxu0 0
  %1605 = vmatpush1.bf16.msra.mxu0 0
  %1606 = vmatprep.subr.bf16.mxu0 0
  %1607 = vmatpush1.bf16.msra.mxu0 0
  %1608 = vmatprep.subr.bf16.mxu0 0
  %1609 = vmatpush1.bf16.msra.mxu0 %v1590
  %1610 = vmatprep.subr.bf16.mxu0 0
  %1611 = vmatpush1.bf16.msra.mxu0 %v1589
  %1612 = vmatprep.subr.bf16.mxu0 0
  %1613 = vmatpush2.bf16.msra.mxu0 0
  %1614 = vmatprep.subr.bf16.mxu0 0
  %1615 = vmatpush2.bf16.msra.mxu0 0
  %1616 = vmatprep.subr.bf16.mxu0 0
  %1617 = vmatpush2.bf16.msra.mxu0 0
  %1618 = vmatprep.subr.bf16.mxu0 0
  %1619 = vmatpush2.bf16.msra.mxu0 0
  %1620 = vmatprep.subr.bf16.mxu0 0
  %1621 = vmatpush2.bf16.msra.mxu0 0
  %1622 = vmatprep.subr.bf16.mxu0 0
  %1623 = vmatpush2.bf16.msra.mxu0 0
  %1624 = vmatprep.subr.bf16.mxu0 0
  %1625 = vmatpush2.bf16.msra.mxu0 0
  %1626 = vmatprep.subr.bf16.mxu0 0
  %1627 = vmatpush2.bf16.msra.mxu0 0
  %1628 = vmatprep.mubr.bf16.mxu0 0
  %1629 = vmatmul.mubr.bf16.gmra.mxu0 %v1594
  %v1630 = vpop.f32.mrf.mxu0
  %v1631 = vadd.f32 %v1579, %v1630
  %v1632 = vpop.f32.mrf.mxu0
  %v1633 = vpop.f32.mrf.mxu0
  %v1634 = vpop.f32.mrf.mxu0
  %1635 = vdwg.mxu0
  %vm1636 = vcmask 1024
  %1637 = vst.msk [vmem:[%s23] sm:$0x3] %vm1636, %v1631
  // Predicated region
  $region94: #{mfvit_forward.1} parent=0 // pred_check
    _
  $region95: #{mfvit_forward.1} parent=0 // pred_check_branch
    %1639 = sbr.rel (0) target = $region97
  $region96: #{mfvit_forward.1} parent=0 // pred_region
    _
  $region97: #{mfvit_forward.1} parent=0 // pred_fallthru
    _
  // Predicated region
  $region98: #{mfvit_forward.1} parent=0 // pred_check
    _
  $region99: #{mfvit_forward.1} parent=0 // pred_check_branch
    %1641 = sbr.rel (0) target = $region101
  $region100: #{mfvit_forward.1} parent=0 // pred_region
    _
  $region101: #{mfvit_forward.1} parent=0 // pred_fallthru
    _

</llo_original>
